<compile_context>
chip_gen: v7x
topology: tpu7x:2x2x1
jax: 0.10.0
libtpu: 0.0.40
codegen_flags: <defaults>
</compile_context>

<pallas_src>
import jax
import jax.numpy as jnp
from jax.experimental import pallas as pl
from jax.experimental.pallas import tpu as pltpu


def _round_up(x, m):
    return (x + m - 1) // m * m


def _graph_conv_kernel(occ_ref, a_ref, x_ref, w_ref, b_ref, o_ref,
                       acc_ref, rowsum_ref):
    i = pl.program_id(0)          # destination-row tile
    k = pl.program_id(1)          # source-column (reduction) tile
    nk = pl.num_programs(1)

    @pl.when(k == 0)
    def _init():
        acc_ref[...] = jnp.zeros_like(acc_ref)
        rowsum_ref[...] = jnp.zeros_like(rowsum_ref)

    # Block-sparse skip: only run the MXU / row-sum if this A block has edges.
    @pl.when(occ_ref[i * nk + k] != 0)
    def _accumulate():
        a = a_ref[...]                                            # bf16 (tm, tk)
        acc_ref[...] += jnp.dot(a, x_ref[...],                    # bf16 MXU, f32 acc
                                preferred_element_type=jnp.float32)
        rowsum_ref[...] += jnp.sum(a.astype(jnp.float32), axis=-1,
                                   keepdims=True)                 # for the bias term

    @pl.when(k == nk - 1)
    def _finalize():
        # (A @ X) @ W  — second MXU pass once per row tile, bf16 operands.
        h = jnp.dot(acc_ref[...].astype(jnp.bfloat16), w_ref[...],
                    preferred_element_type=jnp.float32)
        # bias re-associated through the aggregation: rowsum(A) * b
        h = h + rowsum_ref[...] * b_ref[...]
        o_ref[...] = jnp.maximum(h, 0.0).astype(o_ref.dtype)       # ReLU, f32


def graph_conv(adj, feat, weight, bias, *, tile_m=256, tile_k=256):
    """relu( A @ (feat @ W.T + b) )

    adj:    [N, N]  dense weighted adjacency, A[v, u] = weight of edge u -> v
    feat:   [N, F_in]
    weight: [F_out, F_in]   (nn.Linear layout)
    bias:   [F_out]
    """
    N, F_in = feat.shape
    F_out = weight.shape[0]
    lane = 128

    tile_m = int(min(tile_m, _round_up(N, lane)))
    tile_k = int(min(tile_k, _round_up(N, lane)))

    # Zero-pad to tile / lane multiples (zero rows/cols contribute nothing and
    # the padded output rows/cols are sliced off below).
    Nr = _round_up(N, tile_m)       # padded destination rows
    Nc = _round_up(N, tile_k)       # padded source cols
    Fi = _round_up(F_in, lane)
    Fo = _round_up(F_out, lane)     # lane-dense output

    a = jnp.zeros((Nr, Nc), jnp.float32).at[:N, :N].set(adj.astype(jnp.float32))
    x = jnp.zeros((Nc, Fi), jnp.float32).at[:N, :F_in].set(feat.astype(jnp.float32))
    w = jnp.zeros((Fi, Fo), jnp.float32).at[:F_in, :F_out].set(
        weight.T.astype(jnp.float32))
    b = jnp.zeros((1, Fo), jnp.float32).at[0, :F_out].set(bias.astype(jnp.float32))

    nm, nk = Nr // tile_m, Nc // tile_k

    # Per-(row-tile, K-tile) occupancy, flattened to 1D for compact SMEM layout.
    occ = (jnp.abs(a).reshape(nm, tile_m, nk, tile_k).sum(axis=(1, 3)) > 0)
    occ = occ.reshape(-1).astype(jnp.int32)

    # bf16 MXU operands; accumulation / bias / ReLU stay f32.
    a_bf = a.astype(jnp.bfloat16)
    x_bf = x.astype(jnp.bfloat16)
    w_bf = w.astype(jnp.bfloat16)

    out = pl.pallas_call(
        _graph_conv_kernel,
        out_shape=jax.ShapeDtypeStruct((Nr, Fo), jnp.float32),
        grid_spec=pltpu.PrefetchScalarGridSpec(
            num_scalar_prefetch=1,                     # occupancy map -> SMEM
            grid=(nm, nk),                             # rows outer, K (reduction) last
            in_specs=[
                # A tile: (dst rows, src cols) — bounded VMEM regardless of N
                pl.BlockSpec((tile_m, tile_k), lambda i, k, _occ: (i, k)),
                # X tile: source-node rows matching this K tile
                pl.BlockSpec((tile_k, Fi), lambda i, k, _occ: (k, 0)),
                # full (transposed) weight, resident
                pl.BlockSpec((Fi, Fo), lambda i, k, _occ: (0, 0)),
                # bias row, resident
                pl.BlockSpec((1, Fo), lambda i, k, _occ: (0, 0)),
            ],
            out_specs=pl.BlockSpec((tile_m, Fo), lambda i, k, _occ: (i, 0)),
            scratch_shapes=[
                pltpu.VMEM((tile_m, Fi), jnp.float32),   # A@X accumulator
                pltpu.VMEM((tile_m, 1), jnp.float32),    # rowsum(A) accumulator
            ],
        ),
        compiler_params=pltpu.CompilerParams(
            dimension_semantics=("parallel", "arbitrary"),   # megacore on row tiles
            vmem_limit_bytes=32 * 1024 * 1024,               # explicit budget (v7x-safe)
        ),
    )(occ, a_bf, x_bf, w_bf, b)

    return out[:N, :F_out]


if __name__ == "__main__":
    key = jax.random.PRNGKey(0)
    k_feat, k_w, k_b, k_mask, k_e = jax.random.split(key, 5)

    N = 512          # number of nodes
    F_in = 128       # in_feats
    F_out = 128      # out_feats

    feat = jax.random.normal(k_feat, (N, F_in), dtype=jnp.float32)
    # nn.Linear(in_feats, out_feats): weight [F_out, F_in], bias [F_out]
    weight = jax.random.normal(k_w, (F_out, F_in), dtype=jnp.float32) * 0.1
    bias = jax.random.normal(k_b, (F_out,), dtype=jnp.float32) * 0.1

    # Random sparse weighted graph as dense adjacency A[v, u]
    mask = (jax.random.uniform(k_mask, (N, N)) < 0.1).astype(jnp.float32)
    edge_w = jax.random.uniform(k_e, (N, N), dtype=jnp.float32)
    adj = mask * edge_w

    out = graph_conv(adj, feat, weight, bias, tile_m=256, tile_k=256)
    out = jax.block_until_ready(out)

    # Pure-JAX f32 reference of the module semantics.
    ref = jnp.maximum(adj @ (feat @ weight.T + bias), 0.0)

    # bf16 MXU operands -> allow bf16-level tolerance vs the f32 reference.
    rel = jnp.linalg.norm(out - ref) / jnp.linalg.norm(ref)
    assert rel < 2e-2, f"relative Frobenius error too large: {rel}"
    assert jnp.allclose(out, ref, atol=0.3, rtol=0.03), "mismatch vs reference"

    print("KERNEL_OK")
</pallas_src>

<mosaic_0001>
module attributes {stable_mosaic.version = 11 : i64} {
  func.func @_graph_conv_kernel(%arg0: i32, %arg1: i32, %arg2: memref<4xi32, #tpu.memory_space<smem>>, %arg3: memref<256x256xbf16, #tpu.memory_space<vmem>>, %arg4: memref<256x128xbf16, #tpu.memory_space<vmem>>, %arg5: memref<128x128xbf16, #tpu.memory_space<vmem>>, %arg6: memref<1x128xf32, #tpu.memory_space<vmem>>, %arg7: memref<256x128xf32, #tpu.memory_space<vmem>>, %arg8: memref<256x128xf32, #tpu.memory_space<vmem>>, %arg9: memref<256x1xf32, #tpu.memory_space<vmem>>) attributes {dimension_semantics = [#tpu.dimension_semantics<parallel>, #tpu.dimension_semantics<arbitrary>], iteration_bounds = array<i64: 2, 2>, scalar_prefetch = 1 : i64, scratch_operands = 2 : i64, tpu.core_type = #tpu.core_type<tc>, window_params = [{transform_indices = @transform_0, window_bounds = array<i64: 256, 256>}, {transform_indices = @transform_1, window_bounds = array<i64: 256, 128>}, {pipeline_mode = #tpu.pipeline_mode<synchronous>, transform_indices = @transform_2, window_bounds = array<i64: 128, 128>}, {pipeline_mode = #tpu.pipeline_mode<synchronous>, transform_indices = @transform_3, window_bounds = array<i64: 1, 128>}, {transform_indices = @transform_4, window_bounds = array<i64: 256, 128>}]} {
    %c0_i32 = arith.constant 0 : i32
    %0 = arith.cmpi eq, %arg1, %c0_i32 : i32
    %1 = arith.extui %0 : i1 to i32
    %c0_i32_0 = arith.constant 0 : i32
    %2 = arith.cmpi ne, %1, %c0_i32_0 : i32
    scf.if %2 {
      %cst = arith.constant 0.000000e+00 : f32
      %13 = vector.broadcast %cst : f32 to vector<256x128xf32>
      %c0 = arith.constant 0 : index
      %c0_4 = arith.constant 0 : index
      %14 = vector.load %arg8[%c0, %c0_4] : memref<256x128xf32, #tpu.memory_space<vmem>>, vector<256x128xf32>
      tpu.vector_store %arg8[%c0, %c0_4], %13 {strides = array<i32>} : memref<256x128xf32, #tpu.memory_space<vmem>>, vector<256x128xf32>,
      %cst_5 = arith.constant 0.000000e+00 : f32
      %15 = vector.broadcast %cst_5 : f32 to vector<256x1xf32>
      %c0_6 = arith.constant 0 : index
      %c0_7 = arith.constant 0 : index
      %16 = vector.load %arg9[%c0_6, %c0_7] : memref<256x1xf32, #tpu.memory_space<vmem>>, vector<256x1xf32>
      tpu.vector_store %arg9[%c0_6, %c0_7], %15 {strides = array<i32>} : memref<256x1xf32, #tpu.memory_space<vmem>>, vector<256x1xf32>,
    } else {
    }
    %c2_i32 = arith.constant 2 : i32
    %3 = arith.muli %arg0, %c2_i32 : i32
    %4 = arith.addi %3, %arg1 : i32
    %5 = arith.index_cast %4 : i32 to index
    %6 = memref.load %arg2[%5] : memref<4xi32, #tpu.memory_space<smem>>
    %c0_i32_1 = arith.constant 0 : i32
    %7 = arith.cmpi ne, %6, %c0_i32_1 : i32
    %8 = arith.extui %7 : i1 to i32
    %c0_i32_2 = arith.constant 0 : i32
    %9 = arith.cmpi ne, %8, %c0_i32_2 : i32
    scf.if %9 {
      %c0 = arith.constant 0 : index
      %c0_4 = arith.constant 0 : index
      %13 = vector.load %arg3[%c0, %c0_4] : memref<256x256xbf16, #tpu.memory_space<vmem>>, vector<256x256xbf16>
      %c0_5 = arith.constant 0 : index
      %c0_6 = arith.constant 0 : index
      %14 = vector.load %arg8[%c0_5, %c0_6] : memref<256x128xf32, #tpu.memory_space<vmem>>, vector<256x128xf32>
      %c0_7 = arith.constant 0 : index
      %c0_8 = arith.constant 0 : index
      %15 = vector.load %arg4[%c0_7, %c0_8] : memref<256x128xbf16, #tpu.memory_space<vmem>>, vector<256x128xbf16>
      %cst = arith.constant dense<0.000000e+00> : vector<256x128xf32>
      %16 = tpu.matmul %13, %15, %cst {dimension_numbers = #tpu.dot_dimension_numbers<[1], [0], [0], [1], [0, 0, 1, 1], [], []>} : vector<256x256xbf16>, vector<256x128xbf16>, vector<256x128xf32> -> vector<256x128xf32>
      %17 = arith.addf %14, %16 : vector<256x128xf32>
      %c0_9 = arith.constant 0 : index
      %c0_10 = arith.constant 0 : index
      %18 = vector.load %arg8[%c0_9, %c0_10] : memref<256x128xf32, #tpu.memory_space<vmem>>, vector<256x128xf32>
      tpu.vector_store %arg8[%c0_9, %c0_10], %17 {strides = array<i32>} : memref<256x128xf32, #tpu.memory_space<vmem>>, vector<256x128xf32>,
      %c0_11 = arith.constant 0 : index
      %c0_12 = arith.constant 0 : index
      %19 = vector.load %arg9[%c0_11, %c0_12] : memref<256x1xf32, #tpu.memory_space<vmem>>, vector<256x1xf32>
      %20 = arith.extf %13 : vector<256x256xbf16> to vector<256x256xf32>
      %cst_13 = arith.constant dense<0.000000e+00> : vector<256xf32>
      %21 = vector.multi_reduction <add>, %20, %cst_13 [1] : vector<256x256xf32> to vector<256xf32>
      %22 = vector.shape_cast %21 : vector<256xf32> to vector<256x1xf32>
      %23 = arith.addf %19, %22 : vector<256x1xf32>
      %c0_14 = arith.constant 0 : index
      %c0_15 = arith.constant 0 : index
      %24 = vector.load %arg9[%c0_14, %c0_15] : memref<256x1xf32, #tpu.memory_space<vmem>>, vector<256x1xf32>
      tpu.vector_store %arg9[%c0_14, %c0_15], %23 {strides = array<i32>} : memref<256x1xf32, #tpu.memory_space<vmem>>, vector<256x1xf32>,
    } else {
    }
    %c1_i32 = arith.constant 1 : i32
    %10 = arith.cmpi eq, %arg1, %c1_i32 : i32
    %11 = arith.extui %10 : i1 to i32
    %c0_i32_3 = arith.constant 0 : i32
    %12 = arith.cmpi ne, %11, %c0_i32_3 : i32
    scf.if %12 {
      %c0 = arith.constant 0 : index
      %c0_4 = arith.constant 0 : index
      %13 = vector.load %arg8[%c0, %c0_4] : memref<256x128xf32, #tpu.memory_space<vmem>>, vector<256x128xf32>
      %14 = arith.truncf %13 : vector<256x128xf32> to vector<256x128xbf16>
      %c0_5 = arith.constant 0 : index
      %c0_6 = arith.constant 0 : index
      %15 = vector.load %arg5[%c0_5, %c0_6] : memref<128x128xbf16, #tpu.memory_space<vmem>>, vector<128x128xbf16>
      %cst = arith.constant dense<0.000000e+00> : vector<256x128xf32>
      %16 = tpu.matmul %14, %15, %cst {dimension_numbers = #tpu.dot_dimension_numbers<[1], [0], [0], [1], [0, 0, 1, 1], [], []>} : vector<256x128xbf16>, vector<128x128xbf16>, vector<256x128xf32> -> vector<256x128xf32>
      %c0_7 = arith.constant 0 : index
      %c0_8 = arith.constant 0 : index
      %17 = vector.load %arg9[%c0_7, %c0_8] : memref<256x1xf32, #tpu.memory_space<vmem>>, vector<256x1xf32>
      %c0_9 = arith.constant 0 : index
      %c0_10 = arith.constant 0 : index
      %18 = vector.load %arg6[%c0_9, %c0_10] : memref<1x128xf32, #tpu.memory_space<vmem>>, vector<1x128xf32>
      %19 = vector.broadcast %17 : vector<256x1xf32> to vector<256x128xf32>
      %20 = vector.broadcast %18 : vector<1x128xf32> to vector<256x128xf32>
      %21 = arith.mulf %19, %20 : vector<256x128xf32>
      %22 = arith.addf %16, %21 : vector<256x128xf32>
      %cst_11 = arith.constant 0.000000e+00 : f32
      %23 = vector.broadcast %cst_11 : f32 to vector<256x128xf32>
      %24 = arith.maximumf %22, %23 : vector<256x128xf32>
      %c0_12 = arith.constant 0 : index
      %c0_13 = arith.constant 0 : index
      %25 = vector.load %arg7[%c0_12, %c0_13] : memref<256x128xf32, #tpu.memory_space<vmem>>, vector<256x128xf32>
      tpu.vector_store %arg7[%c0_12, %c0_13], %24 {strides = array<i32>} : memref<256x128xf32, #tpu.memory_space<vmem>>, vector<256x128xf32>,
    } else {
    }
    return
  }
  func.func @transform_0(%arg0: i32, %arg1: i32, %arg2: memref<4xi32, #tpu.memory_space<smem>>) -> (i32, i32) {
    %c0_i32 = arith.constant 0 : i32
    return %arg0, %arg1 : i32, i32
  }
  func.func @transform_1(%arg0: i32, %arg1: i32, %arg2: memref<4xi32, #tpu.memory_space<smem>>) -> (i32, i32) {
    %c0_i32 = arith.constant 0 : i32
    %c0_i32_0 = arith.constant 0 : i32
    return %arg1, %c0_i32 : i32, i32
  }
  func.func @transform_2(%arg0: i32, %arg1: i32, %arg2: memref<4xi32, #tpu.memory_space<smem>>) -> (i32, i32) {
    %c0_i32 = arith.constant 0 : i32
    %c0_i32_0 = arith.constant 0 : i32
    %c0_i32_1 = arith.constant 0 : i32
    return %c0_i32, %c0_i32_0 : i32, i32
  }
  func.func @transform_3(%arg0: i32, %arg1: i32, %arg2: memref<4xi32, #tpu.memory_space<smem>>) -> (i32, i32) {
    %c0_i32 = arith.constant 0 : i32
    %c0_i32_0 = arith.constant 0 : i32
    %c0_i32_1 = arith.constant 0 : i32
    return %c0_i32, %c0_i32_0 : i32, i32
  }
  func.func @transform_4(%arg0: i32, %arg1: i32, %arg2: memref<4xi32, #tpu.memory_space<smem>>) -> (i32, i32) {
    %c0_i32 = arith.constant 0 : i32
    %c0_i32_0 = arith.constant 0 : i32
    return %arg0, %c0_i32 : i32, i32
  }
}

</mosaic_0001>

<llo_original>
// kernel: tpu_custom_call.1
$region0: #{tpu_custom_call.1}
  #allocation0 [shape = 'u32[]', space=smem, size = 0x4, offset = 0x4, fixed_abs, tag = 'smem constant byte address 0x4 - core index']
  #allocation1 [shape = 'u32[144,128]{1,0:T(1,128)}', space=vmem, size = 0x12000, scoped, tag = 'internal scratch']
  #allocation2 [shape = 'f32[256,128]{1,0:T(8,128)}', space=vmem, size = 0x20000, scoped, tag = 'scratch operand']
  #allocation3 [shape = 'f32[256,1]{1,0:T(8,128)}', space=vmem, size = 0x20000, scoped, tag = 'scratch operand']
  #allocation4 [shape = 's32[1]{0}', space=sflag, size = 0x4, scoped, tag = 'scoped memory for tpu_custom_call.1']
  #allocation5 [shape = 'u8[512]{0}', space=smem, size = 0x200, scoped, tag = 'prefetched SMEM operand 0']
  %s0 = inlined_call_operand.hbm [shape: s32[4], index: 0, kind: input, shape index: {}]
  %s1 = inlined_call_operand.hbm [shape: bf16[512,512], index: 1, kind: input, shape index: {}]
  %s2 = inlined_call_operand.hbm [shape: bf16[512,128], index: 2, kind: input, shape index: {}]
  %s3 = inlined_call_operand.hbm [shape: bf16[128,128], index: 3, kind: input, shape index: {}]
  %s4 = inlined_call_operand.vmem [shape: f32[1,128], index: 4, kind: input, shape index: {}]
  %s5 = inlined_call_operand.hbm [shape: f32[512,128], index: 5, kind: output, shape index: {}]
  %s6 = sld [smem:[#allocation0]]
  $region73: #{tpu_custom_call.1} parent=0
    _
  %s8 = ssub.s32 1, %s6
  %s9 = scalar_select 0, %s8, %s6
  %11 = dma.hbm_to_smem %s0, 16, [#allocation5], [#allocation4]
  %12 = dma.done [#allocation4], 16
  %13 = sfence
  $region1: #{tpu_custom_call.1} parent=0
    #allocation6 [shape = 'u8[262144]{0}', space=vmem, size = 0x40000, scoped, tag = 'input window, operand 1']
    #allocation7 [shape = 's32[2]{0}', space=sflag, size = 0x8, scoped, tag = 'scoped memory for tpu_custom_call.1']
    #allocation8 [shape = 's32[2]{0}', space=sflag, size = 0x8, scoped, tag = 'scoped memory for tpu_custom_call.1']
    #allocation9 [shape = 'u8[131072]{0}', space=vmem, size = 0x20000, scoped, tag = 'input window, operand 2']
    #allocation10 [shape = 's32[2]{0}', space=sflag, size = 0x8, scoped, tag = 'scoped memory for tpu_custom_call.1']
    #allocation11 [shape = 'u8[32768]{0}', space=vmem, size = 0x8000, scoped, tag = 'input window, operand 3, single buffered']
    #allocation12 [shape = 'u8[262144]{0}', space=vmem, size = 0x40000, scoped, tag = 'output window, operand 0']
    %14 = vsyncpa [#allocation7], 0
    %s15 = scalar_lea.sflag [#allocation7], 1
    %16 = vsyncpa %s15, 0
    %17 = vsyncpa [#allocation10], 0
    %s18 = scalar_lea.sflag [#allocation10], 1
    %19 = vsyncpa %s18, 0
    %20 = vsyncpa [#allocation8], 0
    %s21 = scalar_lea.sflag [#allocation8], 1
    %22 = vsyncpa %s21, 0
    loop: start=0, step=1, limit=6
    $region2: #{tpu_custom_call.1} parent=1 // loop_pre_header
      _
    $region3: #{tpu_custom_call.1} parent=1 // loop_header
      %s24 = sphi 0, %s28
      %p25 = scmp.ge.s32.totalorder %s24, 6
      %s31 = sphi 0, %s43
      %s32 = sphi 0, %s39
      %s33 = sphi 0, %s31
      %s34 = sphi 0, %s32
      %s35 = sphi 0, %s33
      %s36 = sphi 0, %s34
      %s48 = sphi 0, %s50
      %s51 = sphi 0, %s48
      %s52 = sphi 0, %s51
      %s68 = sphi 0, %s52
      %s74 = sphi 0, %s76
      %s77 = sphi 0, %s74
      %s78 = sphi 0, %s77
      %s94 = sphi 0, %s78
      %s98 = sphi 0, %s98
      %s100 = sphi 0, %s98
      %s101 = sphi 0, %s100
      %s115 = sphi 0, %s101
      %s119 = sphi 0, %s119
      %s121 = sphi 0, %s119
      %s122 = sphi 0, %s121
      %s136 = sphi 0, %s122
      %s142 = sphi 0, %s144
      %s145 = sphi 0, %s142
      %s146 = sphi 0, %s145
      %s162 = sphi 0, %s146
    $region4: #{tpu_custom_call.1} parent=1 // loop_header_branch
      %27 = sbr.rel (%p25) target = $region8
    $region5: #{tpu_custom_call.1} parent=1 // loop_body
      %s29 = ssub.s32 %s24, 1
      %s30 = ssub.s32 %s24, 2
      %s37 = sadd.s32 1, %s32
      %p38 = scmp.ge.s32.totalorder %s37, 2
      %s39 = scalar_select %p38, 0, %s37
      %s40 = sadd.s32 1, %s31
      %s41 = scalar_select %p38, %s40, %s31
      %p42 = scmp.ge.s32.totalorder %s41, 2
      %s43 = scalar_select %p42, 0, %s41
      %s44 = ssub.s32 %s31, %s43
      %s45 = ssub.s32 %s32, %s39
      %s46 = sor.u32 %s44, %s45
      %p47 = scmp.eq.s32.totalorder %s46, 0
      %s49 = sadd.s32 %s48, 1
      %s50 = scalar_select %p47, %s48, %s49
      %p53 = pneg %p47
      %p54 = scmp.eq.s32.totalorder %s24, 3
      %p55 = por %p53, %p54
      %p56 = scmp.ne.s32.totalorder %s48, %s51
      %p57 = scmp.eq.s32.totalorder %s24, 0
      %p58 = por %p56, %p57
      %p59 = scmp.ne.s32.totalorder %s48, %s51
      %p60 = scmp.eq.s32.totalorder %s29, 3
      %p61 = por %p59, %p60
      %p62 = scmp.ne.s32.totalorder %s51, %s52
      %p63 = scmp.eq.s32.totalorder %s29, 0
      %p64 = por %p62, %p63
      %p65 = scmp.ne.s32.totalorder %s51, %s52
      %p66 = scmp.eq.s32.totalorder %s30, 3
      %p67 = por %p65, %p66
      %p69 = scmp.ne.s32.totalorder %s52, %s68
      %p70 = scmp.eq.s32.totalorder %s30, 0
      %p71 = por %p69, %p70
      %s72 = ssub.s32 %s32, %s39
      %p73 = scmp.eq.s32.totalorder %s72, 0
      %s75 = sadd.s32 %s74, 1
      %s76 = scalar_select %p73, %s74, %s75
      %p79 = pneg %p73
      %p80 = scmp.eq.s32.totalorder %s24, 3
      %p81 = por %p79, %p80
      %p82 = scmp.ne.s32.totalorder %s74, %s77
      %p83 = scmp.eq.s32.totalorder %s24, 0
      %p84 = por %p82, %p83
      %p85 = scmp.ne.s32.totalorder %s74, %s77
      %p86 = scmp.eq.s32.totalorder %s29, 3
      %p87 = por %p85, %p86
      %p88 = scmp.ne.s32.totalorder %s77, %s78
      %p89 = scmp.eq.s32.totalorder %s29, 0
      %p90 = por %p88, %p89
      %p91 = scmp.ne.s32.totalorder %s77, %s78
      %p92 = scmp.eq.s32.totalorder %s30, 3
      %p93 = por %p91, %p92
      %p95 = scmp.ne.s32.totalorder %s78, %s94
      %p96 = scmp.eq.s32.totalorder %s30, 0
      %p97 = por %p95, %p96
      %s99 = sadd.s32 %s98, 1
      %p102 = scmp.eq.s32.totalorder %s24, 3
      %p103 = scmp.ne.s32.totalorder %s98, %s100
      %p104 = scmp.eq.s32.totalorder %s24, 0
      %p105 = por %p103, %p104
      %p106 = scmp.ne.s32.totalorder %s98, %s100
      %p107 = scmp.eq.s32.totalorder %s29, 3
      %p108 = por %p106, %p107
      %p109 = scmp.ne.s32.totalorder %s100, %s101
      %p110 = scmp.eq.s32.totalorder %s29, 0
      %p111 = por %p109, %p110
      %p112 = scmp.ne.s32.totalorder %s100, %s101
      %p113 = scmp.eq.s32.totalorder %s30, 3
      %p114 = por %p112, %p113
      %p116 = scmp.ne.s32.totalorder %s101, %s115
      %p117 = scmp.eq.s32.totalorder %s30, 0
      %p118 = por %p116, %p117
      %s120 = sadd.s32 %s119, 1
      %p123 = scmp.eq.s32.totalorder %s24, 3
      %p124 = scmp.ne.s32.totalorder %s119, %s121
      %p125 = scmp.eq.s32.totalorder %s24, 0
      %p126 = por %p124, %p125
      %p127 = scmp.ne.s32.totalorder %s119, %s121
      %p128 = scmp.eq.s32.totalorder %s29, 3
      %p129 = por %p127, %p128
      %p130 = scmp.ne.s32.totalorder %s121, %s122
      %p131 = scmp.eq.s32.totalorder %s29, 0
      %p132 = por %p130, %p131
      %p133 = scmp.ne.s32.totalorder %s121, %s122
      %p134 = scmp.eq.s32.totalorder %s30, 3
      %p135 = por %p133, %p134
      %p137 = scmp.ne.s32.totalorder %s122, %s136
      %p138 = scmp.eq.s32.totalorder %s30, 0
      %p139 = por %p137, %p138
      %s140 = ssub.s32 %s31, %s43
      %p141 = scmp.eq.s32.totalorder %s140, 0
      %s143 = sadd.s32 %s142, 1
      %s144 = scalar_select %p141, %s142, %s143
      %p147 = pneg %p141
      %p148 = scmp.eq.s32.totalorder %s24, 3
      %p149 = por %p147, %p148
      %p150 = scmp.ne.s32.totalorder %s142, %s145
      %p151 = scmp.eq.s32.totalorder %s24, 0
      %p152 = por %p150, %p151
      %p153 = scmp.ne.s32.totalorder %s142, %s145
      %p154 = scmp.eq.s32.totalorder %s29, 3
      %p155 = por %p153, %p154
      %p156 = scmp.ne.s32.totalorder %s145, %s146
      %p157 = scmp.eq.s32.totalorder %s29, 0
      %p158 = por %p156, %p157
      %p159 = scmp.ne.s32.totalorder %s145, %s146
      %p160 = scmp.eq.s32.totalorder %s30, 3
      %p161 = por %p159, %p160
      %p163 = scmp.ne.s32.totalorder %s146, %s162
      %p164 = scmp.eq.s32.totalorder %s30, 0
      %p165 = por %p163, %p164
      %p166 = scmp.le.s32.totalorder 1, %s24
      %p167 = scmp.lt.s32.totalorder %s24, 5
      %p168 = pnand %p166, %p167
      %p169 = pneg %p168
      // Predicated region
      $region9: #{tpu_custom_call.1} parent=5 // pred_check
        _
      $region10: #{tpu_custom_call.1} parent=5 // pred_check_branch
        %171 = sbr.rel (%p168) target = $region12
      $region11: #{tpu_custom_call.1} parent=5 // pred_region
        %s172 = ssub.s32 %s24, 1
        // Predicated region
        $region13: #{tpu_custom_call.1} parent=11 // pred_check
          %p173 = pneg %p111
        $region14: #{tpu_custom_call.1} parent=11 // pred_check_branch
          %175 = sbr.rel (%p173) target = $region16
        $region15: #{tpu_custom_call.1} parent=11 // pred_region
          %s177 = ssub.s32 1024, 1024
          %178 = vsyncadd [#allocation10], %s177
          %s179 = sshll.u32 [#allocation11], 4
          %s180 = int_to_ptr.vmem [resolvable:$true] %s179
          %185 = dma.hbm_to_vmem [thread:$0]  %s3, 1024, %s180, [#allocation10], 64, 64, 4
        $region16: #{tpu_custom_call.1} parent=11 // pred_fallthru
          _
        // Predicated region
        $region17: #{tpu_custom_call.1} parent=11 // pred_check
          %p186 = pneg %p132
        $region18: #{tpu_custom_call.1} parent=11 // pred_check_branch
          %188 = sbr.rel (%p186) target = $region20
        $region19: #{tpu_custom_call.1} parent=11 // pred_region
          _
        $region20: #{tpu_custom_call.1} parent=11 // pred_fallthru
          _
      $region12: #{tpu_custom_call.1} parent=5 // pred_fallthru
        _
      %p189 = scmp.lt.s32.totalorder %s24, 4
      // Predicated region
      $region21: #{tpu_custom_call.1} parent=5 // pred_check
        %p190 = pneg %p189
      $region22: #{tpu_custom_call.1} parent=5 // pred_check_branch
        %192 = sbr.rel (%p190) target = $region24
      $region23: #{tpu_custom_call.1} parent=5 // pred_region
        // Predicated region
        $region25: #{tpu_custom_call.1} parent=23 // pred_check
          %p193 = pneg %p58
        $region26: #{tpu_custom_call.1} parent=23 // pred_check_branch
          %195 = sbr.rel (%p193) target = $region28
        $region27: #{tpu_custom_call.1} parent=23 // pred_region
          %s196 = sand.u32 %s48, 1
          %s197 = scalar_lea.sflag [#allocation7], %s196
          %s198 = sand.u32 %s48, 1
          %s199 = smul.addr %s198, 256
          %s200 = scalar_lea.vmem [#allocation6], %s199
          %s201 = smul.u32 32, %s31
          %s202 = smul.u32 2, %s32
          %s204 = ssub.s32 4096, 4096
          %205 = vsyncadd %s197, %s204
          %s206 = smul.addr %s201, 4
          %s207 = sadd.s32 %s202, %s206
          %s208 = smul.addr %s207, 64
          %s209 = scalar_lea.hbm %s1, %s208
          %s210 = sshll.u32 %s200, 4
          %s211 = int_to_ptr.vmem [resolvable:$true] %s210
          %216 = dma.hbm_to_vmem [thread:$0]  %s209, 4096, %s211, %s197, 256, 128, 8
        $region28: #{tpu_custom_call.1} parent=23 // pred_fallthru
          _
        // Predicated region
        $region29: #{tpu_custom_call.1} parent=23 // pred_check
          %p217 = pneg %p84
        $region30: #{tpu_custom_call.1} parent=23 // pred_check_branch
          %219 = sbr.rel (%p217) target = $region32
        $region31: #{tpu_custom_call.1} parent=23 // pred_region
          %s220 = sand.u32 %s24, 1
          %s221 = scalar_lea.sflag [#allocation10], %s220
          %s222 = sand.u32 %s74, 1
          %s223 = smul.addr %s222, 128
          %s224 = scalar_lea.vmem [#allocation9], %s223
          %s225 = smul.u32 32, %s32
          %s227 = ssub.s32 2048, 2048
          %228 = vsyncadd %s221, %s227
          %s229 = smul.addr %s225, 64
          %s230 = scalar_lea.hbm %s2, %s229
          %s231 = sshll.u32 %s224, 4
          %s232 = int_to_ptr.vmem [resolvable:$true] %s231
          %237 = dma.hbm_to_vmem [thread:$0]  %s230, 2048, %s232, %s221, 64, 64, 4
        $region32: #{tpu_custom_call.1} parent=23 // pred_fallthru
          _
      $region24: #{tpu_custom_call.1} parent=5 // pred_fallthru
        _
      %p238 = scmp.le.s32.totalorder 1, %s24
      %p239 = scmp.lt.s32.totalorder %s24, 5
      %p240 = pnand %p238, %p239
      %p241 = pneg %p240
      // Predicated region
      $region33: #{tpu_custom_call.1} parent=5 // pred_check
        _
      $region34: #{tpu_custom_call.1} parent=5 // pred_check_branch
        %243 = sbr.rel (%p240) target = $region36
      $region35: #{tpu_custom_call.1} parent=5 // pred_region
        %s244 = ssub.s32 %s24, 1
        %s245 = sand.u32 %s51, 1
        %s246 = scalar_lea.sflag [#allocation7], %s245
        %s247 = sand.u32 %s51, 1
        %s248 = smul.addr %s247, 256
        %s249 = scalar_lea.vmem [#allocation6], %s248
        // Predicated region
        $region37: #{tpu_custom_call.1} parent=35 // pred_check
          %p250 = pneg %p64
        $region38: #{tpu_custom_call.1} parent=35 // pred_check_branch
          %252 = sbr.rel (%p250) target = $region40
        $region39: #{tpu_custom_call.1} parent=35 // pred_region
          %253 = dma.done %s246, 4096
        $region40: #{tpu_custom_call.1} parent=35 // pred_fallthru
          _
        %s254 = sand.u32 %s29, 1
        %s255 = scalar_lea.sflag [#allocation10], %s254
        %s256 = sand.u32 %s77, 1
        %s257 = smul.addr %s256, 128
        %s258 = scalar_lea.vmem [#allocation9], %s257
        // Predicated region
        $region41: #{tpu_custom_call.1} parent=35 // pred_check
          %p259 = pneg %p90
        $region42: #{tpu_custom_call.1} parent=35 // pred_check_branch
          %261 = sbr.rel (%p259) target = $region44
        $region43: #{tpu_custom_call.1} parent=35 // pred_region
          %262 = dma.done %s255, 2048
        $region44: #{tpu_custom_call.1} parent=35 // pred_fallthru
          _
        // Predicated region
        $region45: #{tpu_custom_call.1} parent=35 // pred_check
          %p263 = pneg %p111
        $region46: #{tpu_custom_call.1} parent=35 // pred_check_branch
          %265 = sbr.rel (%p263) target = $region48
        $region47: #{tpu_custom_call.1} parent=35 // pred_region
          %266 = dma.done [#allocation10], 1024
        $region48: #{tpu_custom_call.1} parent=35 // pred_fallthru
          _
        %s267 = sand.u32 %s51, 1
        %s268 = scalar_lea.sflag [#allocation7], %s267
        %s269 = sand.u32 %s51, 1
        %s270 = smul.addr %s269, 256
        %s271 = scalar_lea.vmem [#allocation6], %s270
        %p272 = pneg %p64
        %p273 = pneg %p61
        %s274 = sand.u32 %s29, 1
        %s275 = scalar_lea.sflag [#allocation10], %s274
        %s276 = sand.u32 %s77, 1
        %s277 = smul.addr %s276, 128
        %s278 = scalar_lea.vmem [#allocation9], %s277
        %p279 = pneg %p90
        %p280 = pneg %p87
        %p281 = pneg %p111
        %p282 = pneg %p108
        %p283 = pneg %p132
        %p284 = pneg %p129
        %p285 = pneg %p158
        %p286 = pneg %p155
        %s287 = sand.u32 %s145, 1
        %s288 = scalar_lea.sflag [#allocation8], %s287
        %s289 = sand.u32 %s145, 1
        %s290 = smul.addr %s289, 256
        %s291 = scalar_lea.vmem [#allocation12], %s290
        %s292 = smul.u32 32, %s33
        %s293 = smul.u32 2, %s34
        %s294 = smul.u32 32, %s34
        %s295 = smul.u32 32, %s33
        %p297 = scmp.eq.s32.totalorder %s34, 0
        // Predicated region
        $region49: #{tpu_custom_call.1} parent=35 // pred_check
          %p298 = pneg %p297
        $region50: #{tpu_custom_call.1} parent=35 // pred_check_branch
          %300 = sbr.rel (%p298) target = $region52
        $region51: #{tpu_custom_call.1} parent=35 // pred_region
          %301 = vst [vmem:[#allocation2] sm:$0xff] 0.0
          %302 = vst [vmem:[#allocation2 + $0x8] sm:$0xff] 0.0
          %303 = vst [vmem:[#allocation2 + $0x10] sm:$0xff] 0.0
          %304 = vst [vmem:[#allocation2 + $0x18] sm:$0xff] 0.0
          %305 = vst [vmem:[#allocation2 + $0x20] sm:$0xff] 0.0
          %306 = vst [vmem:[#allocation2 + $0x28] sm:$0xff] 0.0
          %307 = vst [vmem:[#allocation2 + $0x30] sm:$0xff] 0.0
          %308 = vst [vmem:[#allocation2 + $0x38] sm:$0xff] 0.0
          %309 = vst [vmem:[#allocation2 + $0x40] sm:$0xff] 0.0
          %310 = vst [vmem:[#allocation2 + $0x48] sm:$0xff] 0.0
          %311 = vst [vmem:[#allocation2 + $0x50] sm:$0xff] 0.0
          %312 = vst [vmem:[#allocation2 + $0x58] sm:$0xff] 0.0
          %313 = vst [vmem:[#allocation2 + $0x60] sm:$0xff] 0.0
          %314 = vst [vmem:[#allocation2 + $0x68] sm:$0xff] 0.0
          %315 = vst [vmem:[#allocation2 + $0x70] sm:$0xff] 0.0
          %316 = vst [vmem:[#allocation2 + $0x78] sm:$0xff] 0.0
          %317 = vst [vmem:[#allocation2 + $0x80] sm:$0xff] 0.0
          %318 = vst [vmem:[#allocation2 + $0x88] sm:$0xff] 0.0
          %319 = vst [vmem:[#allocation2 + $0x90] sm:$0xff] 0.0
          %320 = vst [vmem:[#allocation2 + $0x98] sm:$0xff] 0.0
          %321 = vst [vmem:[#allocation2 + $0xa0] sm:$0xff] 0.0
          %322 = vst [vmem:[#allocation2 + $0xa8] sm:$0xff] 0.0
          %323 = vst [vmem:[#allocation2 + $0xb0] sm:$0xff] 0.0
          %324 = vst [vmem:[#allocation2 + $0xb8] sm:$0xff] 0.0
          %325 = vst [vmem:[#allocation2 + $0xc0] sm:$0xff] 0.0
          %326 = vst [vmem:[#allocation2 + $0xc8] sm:$0xff] 0.0
          %327 = vst [vmem:[#allocation2 + $0xd0] sm:$0xff] 0.0
          %328 = vst [vmem:[#allocation2 + $0xd8] sm:$0xff] 0.0
          %329 = vst [vmem:[#allocation2 + $0xe0] sm:$0xff] 0.0
          %330 = vst [vmem:[#allocation2 + $0xe8] sm:$0xff] 0.0
          %331 = vst [vmem:[#allocation2 + $0xf0] sm:$0xff] 0.0
          %332 = vst [vmem:[#allocation2 + $0xf8] sm:$0xff] 0.0
          %vm333 = vcmask 7168
          %334 = vst.msk [vmem:[#allocation3] sm:$0xff] %vm333, 0.0
          %335 = vst.msk [vmem:[#allocation3 + $0x8] sm:$0xff] %vm333, 0.0
          %336 = vst.msk [vmem:[#allocation3 + $0x10] sm:$0xff] %vm333, 0.0
          %337 = vst.msk [vmem:[#allocation3 + $0x18] sm:$0xff] %vm333, 0.0
          %338 = vst.msk [vmem:[#allocation3 + $0x20] sm:$0xff] %vm333, 0.0
          %339 = vst.msk [vmem:[#allocation3 + $0x28] sm:$0xff] %vm333, 0.0
          %340 = vst.msk [vmem:[#allocation3 + $0x30] sm:$0xff] %vm333, 0.0
          %341 = vst.msk [vmem:[#allocation3 + $0x38] sm:$0xff] %vm333, 0.0
          %342 = vst.msk [vmem:[#allocation3 + $0x40] sm:$0xff] %vm333, 0.0
          %343 = vst.msk [vmem:[#allocation3 + $0x48] sm:$0xff] %vm333, 0.0
          %344 = vst.msk [vmem:[#allocation3 + $0x50] sm:$0xff] %vm333, 0.0
          %345 = vst.msk [vmem:[#allocation3 + $0x58] sm:$0xff] %vm333, 0.0
          %346 = vst.msk [vmem:[#allocation3 + $0x60] sm:$0xff] %vm333, 0.0
          %347 = vst.msk [vmem:[#allocation3 + $0x68] sm:$0xff] %vm333, 0.0
          %348 = vst.msk [vmem:[#allocation3 + $0x70] sm:$0xff] %vm333, 0.0
          %349 = vst.msk [vmem:[#allocation3 + $0x78] sm:$0xff] %vm333, 0.0
          %350 = vst.msk [vmem:[#allocation3 + $0x80] sm:$0xff] %vm333, 0.0
          %351 = vst.msk [vmem:[#allocation3 + $0x88] sm:$0xff] %vm333, 0.0
          %352 = vst.msk [vmem:[#allocation3 + $0x90] sm:$0xff] %vm333, 0.0
          %353 = vst.msk [vmem:[#allocation3 + $0x98] sm:$0xff] %vm333, 0.0
          %354 = vst.msk [vmem:[#allocation3 + $0xa0] sm:$0xff] %vm333, 0.0
          %355 = vst.msk [vmem:[#allocation3 + $0xa8] sm:$0xff] %vm333, 0.0
          %356 = vst.msk [vmem:[#allocation3 + $0xb0] sm:$0xff] %vm333, 0.0
          %357 = vst.msk [vmem:[#allocation3 + $0xb8] sm:$0xff] %vm333, 0.0
          %358 = vst.msk [vmem:[#allocation3 + $0xc0] sm:$0xff] %vm333, 0.0
          %359 = vst.msk [vmem:[#allocation3 + $0xc8] sm:$0xff] %vm333, 0.0
          %360 = vst.msk [vmem:[#allocation3 + $0xd0] sm:$0xff] %vm333, 0.0
          %361 = vst.msk [vmem:[#allocation3 + $0xd8] sm:$0xff] %vm333, 0.0
          %362 = vst.msk [vmem:[#allocation3 + $0xe0] sm:$0xff] %vm333, 0.0
          %363 = vst.msk [vmem:[#allocation3 + $0xe8] sm:$0xff] %vm333, 0.0
          %364 = vst.msk [vmem:[#allocation3 + $0xf0] sm:$0xff] %vm333, 0.0
          %365 = vst.msk [vmem:[#allocation3 + $0xf8] sm:$0xff] %vm333, 0.0
        $region52: #{tpu_custom_call.1} parent=35 // pred_fallthru
          _
        %s366 = smul.u32 %s33, 2
        %s367 = sadd.s32 %s366, %s34
        %s368 = sld [smem:[#allocation5 + %s367]]
        %p369 = scmp.ne.s32.totalorder %s368, 0
        // Predicated region
        $region53: #{tpu_custom_call.1} parent=35 // pred_check
          %p370 = pneg %p369
        $region54: #{tpu_custom_call.1} parent=35 // pred_check_branch
          %372 = sbr.rel (%p370) target = $region56
        $region55: #{tpu_custom_call.1} parent=35 // pred_region
          %v373 = vld [vmem:[%s249] sm:$0xff]
          %v374 = vld [vmem:[%s249 + $0x8] sm:$0xff]
          %v375 = vld [vmem:[%s249 + $0x10] sm:$0xff]
          %v376 = vld [vmem:[%s249 + $0x18] sm:$0xff]
          %v377 = vld [vmem:[%s249 + $0x20] sm:$0xff]
          %v378 = vld [vmem:[%s249 + $0x28] sm:$0xff]
          %v379 = vld [vmem:[%s249 + $0x30] sm:$0xff]
          %v380 = vld [vmem:[%s249 + $0x38] sm:$0xff]
          %v381 = vld [vmem:[%s249 + $0x40] sm:$0xff]
          %v382 = vld [vmem:[%s249 + $0x48] sm:$0xff]
          %v383 = vld [vmem:[%s249 + $0x50] sm:$0xff]
          %v384 = vld [vmem:[%s249 + $0x58] sm:$0xff]
          %v385 = vld [vmem:[%s249 + $0x60] sm:$0xff]
          %v386 = vld [vmem:[%s249 + $0x68] sm:$0xff]
          %v387 = vld [vmem:[%s249 + $0x70] sm:$0xff]
          %v388 = vld [vmem:[%s249 + $0x78] sm:$0xff]
          %v389 = vld [vmem:[%s249 + $0x80] sm:$0xff]
          %v390 = vld [vmem:[%s249 + $0x88] sm:$0xff]
          %v391 = vld [vmem:[%s249 + $0x90] sm:$0xff]
          %v392 = vld [vmem:[%s249 + $0x98] sm:$0xff]
          %v393 = vld [vmem:[%s249 + $0xa0] sm:$0xff]
          %v394 = vld [vmem:[%s249 + $0xa8] sm:$0xff]
          %v395 = vld [vmem:[%s249 + $0xb0] sm:$0xff]
          %v396 = vld [vmem:[%s249 + $0xb8] sm:$0xff]
          %v397 = vld [vmem:[%s249 + $0xc0] sm:$0xff]
          %v398 = vld [vmem:[%s249 + $0xc8] sm:$0xff]
          %v399 = vld [vmem:[%s249 + $0xd0] sm:$0xff]
          %v400 = vld [vmem:[%s249 + $0xd8] sm:$0xff]
          %v401 = vld [vmem:[%s249 + $0xe0] sm:$0xff]
          %v402 = vld [vmem:[%s249 + $0xe8] sm:$0xff]
          %v403 = vld [vmem:[%s249 + $0xf0] sm:$0xff]
          %v404 = vld [vmem:[%s249 + $0xf8] sm:$0xff]
          %v405 = vld [vmem:[#allocation2] sm:$0xff]
          %v406 = vld [vmem:[#allocation2 + $0x8] sm:$0xff]
          %v407 = vld [vmem:[#allocation2 + $0x10] sm:$0xff]
          %v408 = vld [vmem:[#allocation2 + $0x18] sm:$0xff]
          %v409 = vld [vmem:[#allocation2 + $0x20] sm:$0xff]
          %v410 = vld [vmem:[#allocation2 + $0x28] sm:$0xff]
          %v411 = vld [vmem:[#allocation2 + $0x30] sm:$0xff]
          %v412 = vld [vmem:[#allocation2 + $0x38] sm:$0xff]
          %v413 = vld [vmem:[#allocation2 + $0x40] sm:$0xff]
          %v414 = vld [vmem:[#allocation2 + $0x48] sm:$0xff]
          %v415 = vld [vmem:[#allocation2 + $0x50] sm:$0xff]
          %v416 = vld [vmem:[#allocation2 + $0x58] sm:$0xff]
          %v417 = vld [vmem:[#allocation2 + $0x60] sm:$0xff]
          %v418 = vld [vmem:[#allocation2 + $0x68] sm:$0xff]
          %v419 = vld [vmem:[#allocation2 + $0x70] sm:$0xff]
          %v420 = vld [vmem:[#allocation2 + $0x78] sm:$0xff]
          %v421 = vld [vmem:[#allocation2 + $0x80] sm:$0xff]
          %v422 = vld [vmem:[#allocation2 + $0x88] sm:$0xff]
          %v423 = vld [vmem:[#allocation2 + $0x90] sm:$0xff]
          %v424 = vld [vmem:[#allocation2 + $0x98] sm:$0xff]
          %v425 = vld [vmem:[#allocation2 + $0xa0] sm:$0xff]
          %v426 = vld [vmem:[#allocation2 + $0xa8] sm:$0xff]
          %v427 = vld [vmem:[#allocation2 + $0xb0] sm:$0xff]
          %v428 = vld [vmem:[#allocation2 + $0xb8] sm:$0xff]
          %v429 = vld [vmem:[#allocation2 + $0xc0] sm:$0xff]
          %v430 = vld [vmem:[#allocation2 + $0xc8] sm:$0xff]
          %v431 = vld [vmem:[#allocation2 + $0xd0] sm:$0xff]
          %v432 = vld [vmem:[#allocation2 + $0xd8] sm:$0xff]
          %v433 = vld [vmem:[#allocation2 + $0xe0] sm:$0xff]
          %v434 = vld [vmem:[#allocation2 + $0xe8] sm:$0xff]
          %v435 = vld [vmem:[#allocation2 + $0xf0] sm:$0xff]
          %v436 = vld [vmem:[#allocation2 + $0xf8] sm:$0xff]
          %v437 = vld [vmem:[%s258] sm:$0xf]
          %v438 = vld [vmem:[%s258 + $0x4] sm:$0xf]
          %v439 = vld [vmem:[%s258 + $0x8] sm:$0xf]
          %v440 = vld [vmem:[%s258 + $0xc] sm:$0xf]
          %v441 = vld [vmem:[%s258 + $0x10] sm:$0xf]
          %v442 = vld [vmem:[%s258 + $0x14] sm:$0xf]
          %v443 = vld [vmem:[%s258 + $0x18] sm:$0xf]
          %v444 = vld [vmem:[%s258 + $0x1c] sm:$0xf]
          %v445 = vld [vmem:[%s258 + $0x20] sm:$0xf]
          %v446 = vld [vmem:[%s258 + $0x24] sm:$0xf]
          %v447 = vld [vmem:[%s258 + $0x28] sm:$0xf]
          %v448 = vld [vmem:[%s258 + $0x2c] sm:$0xf]
          %v449 = vld [vmem:[%s258 + $0x30] sm:$0xf]
          %v450 = vld [vmem:[%s258 + $0x34] sm:$0xf]
          %v451 = vld [vmem:[%s258 + $0x38] sm:$0xf]
          %v452 = vld [vmem:[%s258 + $0x3c] sm:$0xf]
          %v453 = vld [vmem:[%s258 + $0x40] sm:$0xf]
          %v454 = vld [vmem:[%s258 + $0x44] sm:$0xf]
          %v455 = vld [vmem:[%s258 + $0x48] sm:$0xf]
          %v456 = vld [vmem:[%s258 + $0x4c] sm:$0xf]
          %v457 = vld [vmem:[%s258 + $0x50] sm:$0xf]
          %v458 = vld [vmem:[%s258 + $0x54] sm:$0xf]
          %v459 = vld [vmem:[%s258 + $0x58] sm:$0xf]
          %v460 = vld [vmem:[%s258 + $0x5c] sm:$0xf]
          %v461 = vld [vmem:[%s258 + $0x60] sm:$0xf]
          %v462 = vld [vmem:[%s258 + $0x64] sm:$0xf]
          %v463 = vld [vmem:[%s258 + $0x68] sm:$0xf]
          %v464 = vld [vmem:[%s258 + $0x6c] sm:$0xf]
          %v465 = vld [vmem:[%s258 + $0x70] sm:$0xf]
          %v466 = vld [vmem:[%s258 + $0x74] sm:$0xf]
          %v467 = vld [vmem:[%s258 + $0x78] sm:$0xf]
          %v468 = vld [vmem:[%s258 + $0x7c] sm:$0xf]
          %v501 = vunpack.c.l.b16 %v373
          %v502 = vunpack.c.h.b16 %v373
          %v503 = vunpack.c.l.b16 %v374
          %v504 = vunpack.c.h.b16 %v374
          %v505 = vunpack.c.l.b16 %v375
          %v506 = vunpack.c.h.b16 %v375
          %v507 = vunpack.c.l.b16 %v376
          %v508 = vunpack.c.h.b16 %v376
          %v509 = vunpack.c.l.b16 %v377
          %v510 = vunpack.c.h.b16 %v377
          %v511 = vunpack.c.l.b16 %v378
          %v512 = vunpack.c.h.b16 %v378
          %v513 = vunpack.c.l.b16 %v379
          %v514 = vunpack.c.h.b16 %v379
          %v515 = vunpack.c.l.b16 %v380
          %v516 = vunpack.c.h.b16 %v380
          %v517 = vunpack.c.l.b16 %v381
          %v518 = vunpack.c.h.b16 %v381
          %v519 = vunpack.c.l.b16 %v382
          %v520 = vunpack.c.h.b16 %v382
          %v521 = vunpack.c.l.b16 %v383
          %v522 = vunpack.c.h.b16 %v383
          %v523 = vunpack.c.l.b16 %v384
          %v524 = vunpack.c.h.b16 %v384
          %v525 = vunpack.c.l.b16 %v385
          %v526 = vunpack.c.h.b16 %v385
          %v527 = vunpack.c.l.b16 %v386
          %v528 = vunpack.c.h.b16 %v386
          %v529 = vunpack.c.l.b16 %v387
          %v530 = vunpack.c.h.b16 %v387
          %v531 = vunpack.c.l.b16 %v388
          %v532 = vunpack.c.h.b16 %v388
          %v533 = vunpack.c.l.b16 %v389
          %v534 = vunpack.c.h.b16 %v389
          %v535 = vunpack.c.l.b16 %v390
          %v536 = vunpack.c.h.b16 %v390
          %v537 = vunpack.c.l.b16 %v391
          %v538 = vunpack.c.h.b16 %v391
          %v539 = vunpack.c.l.b16 %v392
          %v540 = vunpack.c.h.b16 %v392
          %v541 = vunpack.c.l.b16 %v393
          %v542 = vunpack.c.h.b16 %v393
          %v543 = vunpack.c.l.b16 %v394
          %v544 = vunpack.c.h.b16 %v394
          %v545 = vunpack.c.l.b16 %v395
          %v546 = vunpack.c.h.b16 %v395
          %v547 = vunpack.c.l.b16 %v396
          %v548 = vunpack.c.h.b16 %v396
          %v549 = vunpack.c.l.b16 %v397
          %v550 = vunpack.c.h.b16 %v397
          %v551 = vunpack.c.l.b16 %v398
          %v552 = vunpack.c.h.b16 %v398
          %v553 = vunpack.c.l.b16 %v399
          %v554 = vunpack.c.h.b16 %v399
          %v555 = vunpack.c.l.b16 %v400
          %v556 = vunpack.c.h.b16 %v400
          %v557 = vunpack.c.l.b16 %v401
          %v558 = vunpack.c.h.b16 %v401
          %v559 = vunpack.c.l.b16 %v402
          %v560 = vunpack.c.h.b16 %v402
          %v561 = vunpack.c.l.b16 %v403
          %v562 = vunpack.c.h.b16 %v403
          %v563 = vunpack.c.l.b16 %v404
          %v564 = vunpack.c.h.b16 %v404
          %v565 = vpack.c.b16 %v503, %v501
          %v566 = vpack.c.b16 %v504, %v502
          %v567 = vpack.c.b16 %v507, %v505
          %v568 = vpack.c.b16 %v508, %v506
          %v569 = vpack.c.b16 %v511, %v509
          %v570 = vpack.c.b16 %v512, %v510
          %v571 = vpack.c.b16 %v515, %v513
          %v572 = vpack.c.b16 %v516, %v514
          %v573 = vpack.c.b16 %v519, %v517
          %v574 = vpack.c.b16 %v520, %v518
          %v575 = vpack.c.b16 %v523, %v521
          %v576 = vpack.c.b16 %v524, %v522
          %v577 = vpack.c.b16 %v527, %v525
          %v578 = vpack.c.b16 %v528, %v526
          %v579 = vpack.c.b16 %v531, %v529
          %v580 = vpack.c.b16 %v532, %v530
          %v581 = vpack.c.b16 %v535, %v533
          %v582 = vpack.c.b16 %v536, %v534
          %v583 = vpack.c.b16 %v539, %v537
          %v584 = vpack.c.b16 %v540, %v538
          %v585 = vpack.c.b16 %v543, %v541
          %v586 = vpack.c.b16 %v544, %v542
          %v587 = vpack.c.b16 %v547, %v545
          %v588 = vpack.c.b16 %v548, %v546
          %v589 = vpack.c.b16 %v551, %v549
          %v590 = vpack.c.b16 %v552, %v550
          %v591 = vpack.c.b16 %v555, %v553
          %v592 = vpack.c.b16 %v556, %v554
          %v593 = vpack.c.b16 %v559, %v557
          %v594 = vpack.c.b16 %v560, %v558
          %v595 = vpack.c.b16 %v563, %v561
          %v596 = vpack.c.b16 %v564, %v562
          %v661 = vunpack.c.l.b16 %v437
          %v662 = vunpack.c.l.b16 %v438
          %v663 = vunpack.c.l.b16 %v439
          %v664 = vunpack.c.l.b16 %v440
          %v665 = vunpack.c.l.b16 %v441
          %v666 = vunpack.c.l.b16 %v442
          %v667 = vunpack.c.l.b16 %v443
          %v668 = vunpack.c.l.b16 %v444
          %v669 = vunpack.c.l.b16 %v445
          %v670 = vunpack.c.l.b16 %v446
          %v671 = vunpack.c.l.b16 %v447
          %v672 = vunpack.c.l.b16 %v448
          %v673 = vunpack.c.l.b16 %v449
          %v674 = vunpack.c.l.b16 %v450
          %v675 = vunpack.c.l.b16 %v451
          %v676 = vunpack.c.l.b16 %v452
          %v677 = vunpack.c.l.b16 %v453
          %v678 = vunpack.c.l.b16 %v454
          %v679 = vunpack.c.l.b16 %v455
          %v680 = vunpack.c.l.b16 %v456
          %v681 = vunpack.c.l.b16 %v457
          %v682 = vunpack.c.l.b16 %v458
          %v683 = vunpack.c.l.b16 %v459
          %v684 = vunpack.c.l.b16 %v460
          %v685 = vunpack.c.l.b16 %v461
          %v686 = vunpack.c.l.b16 %v462
          %v687 = vunpack.c.l.b16 %v463
          %v688 = vunpack.c.l.b16 %v464
          %v689 = vunpack.c.l.b16 %v465
          %v690 = vunpack.c.l.b16 %v466
          %v691 = vunpack.c.l.b16 %v467
          %v692 = vunpack.c.l.b16 %v468
          %v693 = vpack.c.b16 %v662, %v661
          %v694 = vpack.c.b16 %v664, %v663
          %v695 = vpack.c.b16 %v666, %v665
          %v696 = vpack.c.b16 %v668, %v667
          %v697 = vpack.c.b16 %v670, %v669
          %v698 = vpack.c.b16 %v672, %v671
          %v699 = vpack.c.b16 %v674, %v673
          %v700 = vpack.c.b16 %v676, %v675
          %v701 = vpack.c.b16 %v678, %v677
          %v702 = vpack.c.b16 %v680, %v679
          %v703 = vpack.c.b16 %v682, %v681
          %v704 = vpack.c.b16 %v684, %v683
          %v705 = vpack.c.b16 %v686, %v685
          %v706 = vpack.c.b16 %v688, %v687
          %v707 = vpack.c.b16 %v690, %v689
          %v708 = vpack.c.b16 %v692, %v691
          %725 = vmatprep.subr.bf16.mxu0 0
          %726 = vmatpush1.bf16.msra.mxu0 %v693
          %727 = vmatprep.subr.bf16.mxu0 0
          %728 = vmatpush1.bf16.msra.mxu0 %v694
          %729 = vmatprep.subr.bf16.mxu0 0
          %730 = vmatpush1.bf16.msra.mxu0 %v695
          %731 = vmatprep.subr.bf16.mxu0 0
          %732 = vmatpush1.bf16.msra.mxu0 %v696
          %733 = vmatprep.subr.bf16.mxu0 0
          %734 = vmatpush1.bf16.msra.mxu0 %v697
          %735 = vmatprep.subr.bf16.mxu0 0
          %736 = vmatpush1.bf16.msra.mxu0 %v698
          %737 = vmatprep.subr.bf16.mxu0 0
          %738 = vmatpush1.bf16.msra.mxu0 %v699
          %739 = vmatprep.subr.bf16.mxu0 0
          %740 = vmatpush1.bf16.msra.mxu0 %v700
          %741 = vmatprep.subr.bf16.mxu0 0
          %742 = vmatpush1.bf16.msra.mxu0 %v701
          %743 = vmatprep.subr.bf16.mxu0 0
          %744 = vmatpush1.bf16.msra.mxu0 %v702
          %745 = vmatprep.subr.bf16.mxu0 0
          %746 = vmatpush1.bf16.msra.mxu0 %v703
          %747 = vmatprep.subr.bf16.mxu0 0
          %748 = vmatpush1.bf16.msra.mxu0 %v704
          %749 = vmatprep.subr.bf16.mxu0 0
          %750 = vmatpush1.bf16.msra.mxu0 %v705
          %751 = vmatprep.subr.bf16.mxu0 0
          %752 = vmatpush1.bf16.msra.mxu0 %v706
          %753 = vmatprep.subr.bf16.mxu0 0
          %754 = vmatpush1.bf16.msra.mxu0 %v707
          %755 = vmatprep.subr.bf16.mxu0 0
          %756 = vmatpush1.bf16.msra.mxu0 %v708
          %757 = vmatprep.mubr.bf16.mxu0 %v566
          %758 = vmatmul.mubr.bf16.gmra.mrb[0].mxu0 %v565
          %v759 = vpop.f32.mrb[0].mxu0
          %v760 = vadd.f32 0.0, %v759
          %v761 = vpop.f32.mrb[0].mxu0
          %v762 = vpop.f32.mrb[0].mxu0
          %v763 = vadd.f32 0.0, %v762
          %v764 = vpop.f32.mrb[0].mxu0
          %765 = vmatprep.mubr.bf16.mxu0 %v568
          %766 = vmatmul.mubr.bf16.gmra.mrb[0].mxu0 %v567
          %v767 = vpop.f32.mrb[0].mxu0
          %v768 = vadd.f32 0.0, %v767
          %v769 = vpop.f32.mrb[0].mxu0
          %v770 = vpop.f32.mrb[0].mxu0
          %v771 = vadd.f32 0.0, %v770
          %v772 = vpop.f32.mrb[0].mxu0
          %773 = vmatprep.mubr.bf16.mxu0 %v570
          %774 = vmatmul.mubr.bf16.gmra.mrb[0].mxu0 %v569
          %v775 = vpop.f32.mrb[0].mxu0
          %v776 = vadd.f32 0.0, %v775
          %v777 = vpop.f32.mrb[0].mxu0
          %v778 = vpop.f32.mrb[0].mxu0
          %v779 = vadd.f32 0.0, %v778
          %v780 = vpop.f32.mrb[0].mxu0
          %781 = vmatprep.mubr.bf16.mxu0 %v572
          %782 = vmatmul.mubr.bf16.gmra.mrb[0].mxu0 %v571
          %v783 = vpop.f32.mrb[0].mxu0
          %v784 = vadd.f32 0.0, %v783
          %v785 = vpop.f32.mrb[0].mxu0
          %v786 = vpop.f32.mrb[0].mxu0
          %v787 = vadd.f32 0.0, %v786
          %v788 = vpop.f32.mrb[0].mxu0
          %789 = vmatprep.mubr.bf16.mxu0 %v574
          %790 = vmatmul.mubr.bf16.gmra.mrb[0].mxu0 %v573
          %v791 = vpop.f32.mrb[0].mxu0
          %v792 = vadd.f32 0.0, %v791
          %v793 = vpop.f32.mrb[0].mxu0
          %v794 = vpop.f32.mrb[0].mxu0
          %v795 = vadd.f32 0.0, %v794
          %v796 = vpop.f32.mrb[0].mxu0
          %797 = vmatprep.mubr.bf16.mxu0 %v576
          %798 = vmatmul.mubr.bf16.gmra.mrb[0].mxu0 %v575
          %v799 = vpop.f32.mrb[0].mxu0
          %v800 = vadd.f32 0.0, %v799
          %v801 = vpop.f32.mrb[0].mxu0
          %v802 = vpop.f32.mrb[0].mxu0
          %v803 = vadd.f32 0.0, %v802
          %v804 = vpop.f32.mrb[0].mxu0
          %805 = vmatprep.mubr.bf16.mxu0 %v578
          %806 = vmatmul.mubr.bf16.gmra.mrb[0].mxu0 %v577
          %v807 = vpop.f32.mrb[0].mxu0
          %v808 = vadd.f32 0.0, %v807
          %v809 = vpop.f32.mrb[0].mxu0
          %v810 = vpop.f32.mrb[0].mxu0
          %v811 = vadd.f32 0.0, %v810
          %v812 = vpop.f32.mrb[0].mxu0
          %813 = vmatprep.mubr.bf16.mxu0 %v580
          %814 = vmatmul.mubr.bf16.gmra.mrb[0].mxu0 %v579
          %v815 = vpop.f32.mrb[0].mxu0
          %v816 = vadd.f32 0.0, %v815
          %v817 = vpop.f32.mrb[0].mxu0
          %v818 = vpop.f32.mrb[0].mxu0
          %v819 = vadd.f32 0.0, %v818
          %v820 = vpop.f32.mrb[0].mxu0
          %821 = vmatprep.mubr.bf16.mxu0 %v582
          %822 = vmatmul.mubr.bf16.gmra.mrb[0].mxu0 %v581
          %v823 = vpop.f32.mrb[0].mxu0
          %v824 = vadd.f32 0.0, %v823
          %v825 = vpop.f32.mrb[0].mxu0
          %v826 = vpop.f32.mrb[0].mxu0
          %v827 = vadd.f32 0.0, %v826
          %v828 = vpop.f32.mrb[0].mxu0
          %829 = vmatprep.mubr.bf16.mxu0 %v584
          %830 = vmatmul.mubr.bf16.gmra.mrb[0].mxu0 %v583
          %v831 = vpop.f32.mrb[0].mxu0
          %v832 = vadd.f32 0.0, %v831
          %v833 = vpop.f32.mrb[0].mxu0
          %v834 = vpop.f32.mrb[0].mxu0
          %v835 = vadd.f32 0.0, %v834
          %v836 = vpop.f32.mrb[0].mxu0
          %837 = vmatprep.mubr.bf16.mxu0 %v586
          %838 = vmatmul.mubr.bf16.gmra.mrb[0].mxu0 %v585
          %v839 = vpop.f32.mrb[0].mxu0
          %v840 = vadd.f32 0.0, %v839
          %v841 = vpop.f32.mrb[0].mxu0
          %v842 = vpop.f32.mrb[0].mxu0
          %v843 = vadd.f32 0.0, %v842
          %v844 = vpop.f32.mrb[0].mxu0
          %845 = vmatprep.mubr.bf16.mxu0 %v588
          %846 = vmatmul.mubr.bf16.gmra.mrb[0].mxu0 %v587
          %v847 = vpop.f32.mrb[0].mxu0
          %v848 = vadd.f32 0.0, %v847
          %v849 = vpop.f32.mrb[0].mxu0
          %v850 = vpop.f32.mrb[0].mxu0
          %v851 = vadd.f32 0.0, %v850
          %v852 = vpop.f32.mrb[0].mxu0
          %853 = vmatprep.mubr.bf16.mxu0 %v590
          %854 = vmatmul.mubr.bf16.gmra.mrb[0].mxu0 %v589
          %v855 = vpop.f32.mrb[0].mxu0
          %v856 = vadd.f32 0.0, %v855
          %v857 = vpop.f32.mrb[0].mxu0
          %v858 = vpop.f32.mrb[0].mxu0
          %v859 = vadd.f32 0.0, %v858
          %v860 = vpop.f32.mrb[0].mxu0
          %861 = vmatprep.mubr.bf16.mxu0 %v592
          %862 = vmatmul.mubr.bf16.gmra.mrb[0].mxu0 %v591
          %v863 = vpop.f32.mrb[0].mxu0
          %v864 = vadd.f32 0.0, %v863
          %v865 = vpop.f32.mrb[0].mxu0
          %v866 = vpop.f32.mrb[0].mxu0
          %v867 = vadd.f32 0.0, %v866
          %v868 = vpop.f32.mrb[0].mxu0
          %869 = vmatprep.mubr.bf16.mxu0 %v594
          %870 = vmatmul.mubr.bf16.gmra.mrb[0].mxu0 %v593
          %v871 = vpop.f32.mrb[0].mxu0
          %v872 = vadd.f32 0.0, %v871
          %v873 = vpop.f32.mrb[0].mxu0
          %v874 = vpop.f32.mrb[0].mxu0
          %v875 = vadd.f32 0.0, %v874
          %v876 = vpop.f32.mrb[0].mxu0
          %877 = vmatprep.mubr.bf16.mxu0 %v596
          %878 = vmatmul.mubr.bf16.gmra.mrb[0].mxu0 %v595
          %v879 = vpop.f32.mrb[0].mxu0
          %v880 = vadd.f32 0.0, %v879
          %v881 = vpop.f32.mrb[0].mxu0
          %v882 = vpop.f32.mrb[0].mxu0
          %v883 = vadd.f32 0.0, %v882
          %v884 = vpop.f32.mrb[0].mxu0
          %885 = vdwg.mxu0
          %v886 = vadd.f32 %v405, %v760
          %v887 = vadd.f32 %v406, %v763
          %v888 = vadd.f32 %v407, %v768
          %v889 = vadd.f32 %v408, %v771
          %v890 = vadd.f32 %v409, %v776
          %v891 = vadd.f32 %v410, %v779
          %v892 = vadd.f32 %v411, %v784
          %v893 = vadd.f32 %v412, %v787
          %v894 = vadd.f32 %v413, %v792
          %v895 = vadd.f32 %v414, %v795
          %v896 = vadd.f32 %v415, %v800
          %v897 = vadd.f32 %v416, %v803
          %v898 = vadd.f32 %v417, %v808
          %v899 = vadd.f32 %v418, %v811
          %v900 = vadd.f32 %v419, %v816
          %v901 = vadd.f32 %v420, %v819
          %v902 = vadd.f32 %v421, %v824
          %v903 = vadd.f32 %v422, %v827
          %v904 = vadd.f32 %v423, %v832
          %v905 = vadd.f32 %v424, %v835
          %v906 = vadd.f32 %v425, %v840
          %v907 = vadd.f32 %v426, %v843
          %v908 = vadd.f32 %v427, %v848
          %v909 = vadd.f32 %v428, %v851
          %v910 = vadd.f32 %v429, %v856
          %v911 = vadd.f32 %v430, %v859
          %v912 = vadd.f32 %v431, %v864
          %v913 = vadd.f32 %v432, %v867
          %v914 = vadd.f32 %v433, %v872
          %v915 = vadd.f32 %v434, %v875
          %v916 = vadd.f32 %v435, %v880
          %v917 = vadd.f32 %v436, %v883
          %918 = vst [vmem:[#allocation2] sm:$0xff] %v886
          %919 = vst [vmem:[#allocation2 + $0x8] sm:$0xff] %v887
          %920 = vst [vmem:[#allocation2 + $0x10] sm:$0xff] %v888
          %921 = vst [vmem:[#allocation2 + $0x18] sm:$0xff] %v889
          %922 = vst [vmem:[#allocation2 + $0x20] sm:$0xff] %v890
          %923 = vst [vmem:[#allocation2 + $0x28] sm:$0xff] %v891
          %924 = vst [vmem:[#allocation2 + $0x30] sm:$0xff] %v892
          %925 = vst [vmem:[#allocation2 + $0x38] sm:$0xff] %v893
          %926 = vst [vmem:[#allocation2 + $0x40] sm:$0xff] %v894
          %927 = vst [vmem:[#allocation2 + $0x48] sm:$0xff] %v895
          %928 = vst [vmem:[#allocation2 + $0x50] sm:$0xff] %v896
          %929 = vst [vmem:[#allocation2 + $0x58] sm:$0xff] %v897
          %930 = vst [vmem:[#allocation2 + $0x60] sm:$0xff] %v898
          %931 = vst [vmem:[#allocation2 + $0x68] sm:$0xff] %v899
          %932 = vst [vmem:[#allocation2 + $0x70] sm:$0xff] %v900
          %933 = vst [vmem:[#allocation2 + $0x78] sm:$0xff] %v901
          %934 = vst [vmem:[#allocation2 + $0x80] sm:$0xff] %v902
          %935 = vst [vmem:[#allocation2 + $0x88] sm:$0xff] %v903
          %936 = vst [vmem:[#allocation2 + $0x90] sm:$0xff] %v904
          %937 = vst [vmem:[#allocation2 + $0x98] sm:$0xff] %v905
          %938 = vst [vmem:[#allocation2 + $0xa0] sm:$0xff] %v906
          %939 = vst [vmem:[#allocation2 + $0xa8] sm:$0xff] %v907
          %940 = vst [vmem:[#allocation2 + $0xb0] sm:$0xff] %v908
          %941 = vst [vmem:[#allocation2 + $0xb8] sm:$0xff] %v909
          %942 = vst [vmem:[#allocation2 + $0xc0] sm:$0xff] %v910
          %943 = vst [vmem:[#allocation2 + $0xc8] sm:$0xff] %v911
          %944 = vst [vmem:[#allocation2 + $0xd0] sm:$0xff] %v912
          %945 = vst [vmem:[#allocation2 + $0xd8] sm:$0xff] %v913
          %946 = vst [vmem:[#allocation2 + $0xe0] sm:$0xff] %v914
          %947 = vst [vmem:[#allocation2 + $0xe8] sm:$0xff] %v915
          %948 = vst [vmem:[#allocation2 + $0xf0] sm:$0xff] %v916
          %949 = vst [vmem:[#allocation2 + $0xf8] sm:$0xff] %v917
          %v950 = vld [vmem:[#allocation3] sm:$0xff]
          %v951 = vld [vmem:[#allocation3 + $0x8] sm:$0xff]
          %v952 = vld [vmem:[#allocation3 + $0x10] sm:$0xff]
          %v953 = vld [vmem:[#allocation3 + $0x18] sm:$0xff]
          %v954 = vld [vmem:[#allocation3 + $0x20] sm:$0xff]
          %v955 = vld [vmem:[#allocation3 + $0x28] sm:$0xff]
          %v956 = vld [vmem:[#allocation3 + $0x30] sm:$0xff]
          %v957 = vld [vmem:[#allocation3 + $0x38] sm:$0xff]
          %v958 = vld [vmem:[#allocation3 + $0x40] sm:$0xff]
          %v959 = vld [vmem:[#allocation3 + $0x48] sm:$0xff]
          %v960 = vld [vmem:[#allocation3 + $0x50] sm:$0xff]
          %v961 = vld [vmem:[#allocation3 + $0x58] sm:$0xff]
          %v962 = vld [vmem:[#allocation3 + $0x60] sm:$0xff]
          %v963 = vld [vmem:[#allocation3 + $0x68] sm:$0xff]
          %v964 = vld [vmem:[#allocation3 + $0x70] sm:$0xff]
          %v965 = vld [vmem:[#allocation3 + $0x78] sm:$0xff]
          %v966 = vld [vmem:[#allocation3 + $0x80] sm:$0xff]
          %v967 = vld [vmem:[#allocation3 + $0x88] sm:$0xff]
          %v968 = vld [vmem:[#allocation3 + $0x90] sm:$0xff]
          %v969 = vld [vmem:[#allocation3 + $0x98] sm:$0xff]
          %v970 = vld [vmem:[#allocation3 + $0xa0] sm:$0xff]
          %v971 = vld [vmem:[#allocation3 + $0xa8] sm:$0xff]
          %v972 = vld [vmem:[#allocation3 + $0xb0] sm:$0xff]
          %v973 = vld [vmem:[#allocation3 + $0xb8] sm:$0xff]
          %v974 = vld [vmem:[#allocation3 + $0xc0] sm:$0xff]
          %v975 = vld [vmem:[#allocation3 + $0xc8] sm:$0xff]
          %v976 = vld [vmem:[#allocation3 + $0xd0] sm:$0xff]
          %v977 = vld [vmem:[#allocation3 + $0xd8] sm:$0xff]
          %v978 = vld [vmem:[#allocation3 + $0xe0] sm:$0xff]
          %v979 = vld [vmem:[#allocation3 + $0xe8] sm:$0xff]
          %v980 = vld [vmem:[#allocation3 + $0xf0] sm:$0xff]
          %v981 = vld [vmem:[#allocation3 + $0xf8] sm:$0xff]
          %v982 = vunpack.c.l.bf16 %v373
          %v983 = vunpack.c.h.bf16 %v373
          %v984 = vunpack.c.l.bf16 %v374
          %v985 = vunpack.c.h.bf16 %v374
          %v986 = vunpack.c.l.bf16 %v375
          %v987 = vunpack.c.h.bf16 %v375
          %v988 = vunpack.c.l.bf16 %v376
          %v989 = vunpack.c.h.bf16 %v376
          %v990 = vunpack.c.l.bf16 %v377
          %v991 = vunpack.c.h.bf16 %v377
          %v992 = vunpack.c.l.bf16 %v378
          %v993 = vunpack.c.h.bf16 %v378
          %v994 = vunpack.c.l.bf16 %v379
          %v995 = vunpack.c.h.bf16 %v379
          %v996 = vunpack.c.l.bf16 %v380
          %v997 = vunpack.c.h.bf16 %v380
          %v998 = vunpack.c.l.bf16 %v381
          %v999 = vunpack.c.h.bf16 %v381
          %v1000 = vunpack.c.l.bf16 %v382
          %v1001 = vunpack.c.h.bf16 %v382
          %v1002 = vunpack.c.l.bf16 %v383
          %v1003 = vunpack.c.h.bf16 %v383
          %v1004 = vunpack.c.l.bf16 %v384
          %v1005 = vunpack.c.h.bf16 %v384
          %v1006 = vunpack.c.l.bf16 %v385
          %v1007 = vunpack.c.h.bf16 %v385
          %v1008 = vunpack.c.l.bf16 %v386
          %v1009 = vunpack.c.h.bf16 %v386
          %v1010 = vunpack.c.l.bf16 %v387
          %v1011 = vunpack.c.h.bf16 %v387
          %v1012 = vunpack.c.l.bf16 %v388
          %v1013 = vunpack.c.h.bf16 %v388
          %v1014 = vunpack.c.l.bf16 %v389
          %v1015 = vunpack.c.h.bf16 %v389
          %v1016 = vunpack.c.l.bf16 %v390
          %v1017 = vunpack.c.h.bf16 %v390
          %v1018 = vunpack.c.l.bf16 %v391
          %v1019 = vunpack.c.h.bf16 %v391
          %v1020 = vunpack.c.l.bf16 %v392
          %v1021 = vunpack.c.h.bf16 %v392
          %v1022 = vunpack.c.l.bf16 %v393
          %v1023 = vunpack.c.h.bf16 %v393
          %v1024 = vunpack.c.l.bf16 %v394
          %v1025 = vunpack.c.h.bf16 %v394
          %v1026 = vunpack.c.l.bf16 %v395
          %v1027 = vunpack.c.h.bf16 %v395
          %v1028 = vunpack.c.l.bf16 %v396
          %v1029 = vunpack.c.h.bf16 %v396
          %v1030 = vunpack.c.l.bf16 %v397
          %v1031 = vunpack.c.h.bf16 %v397
          %v1032 = vunpack.c.l.bf16 %v398
          %v1033 = vunpack.c.h.bf16 %v398
          %v1034 = vunpack.c.l.bf16 %v399
          %v1035 = vunpack.c.h.bf16 %v399
          %v1036 = vunpack.c.l.bf16 %v400
          %v1037 = vunpack.c.h.bf16 %v400
          %v1038 = vunpack.c.l.bf16 %v401
          %v1039 = vunpack.c.h.bf16 %v401
          %v1040 = vunpack.c.l.bf16 %v402
          %v1041 = vunpack.c.h.bf16 %v402
          %v1042 = vunpack.c.l.bf16 %v403
          %v1043 = vunpack.c.h.bf16 %v403
          %v1044 = vunpack.c.l.bf16 %v404
          %v1045 = vunpack.c.h.bf16 %v404
          %v1046 = vadd.f32 %v982, %v983
          %1047 = vadd.xlane.f32.xlu0 %v1046
          %v1048 = vpop.xlane.xlu0 %1047
          %v1049 = vadd.f32 %v984, %v985
          %1050 = vadd.xlane.f32.xlu0 %v1049
          %v1051 = vpop.xlane.xlu0 %1050
          %v1052 = vadd.f32 %v986, %v987
          %1053 = vadd.xlane.f32.xlu0 %v1052
          %v1054 = vpop.xlane.xlu0 %1053
          %v1055 = vadd.f32 %v988, %v989
          %1056 = vadd.xlane.f32.xlu0 %v1055
          %v1057 = vpop.xlane.xlu0 %1056
          %v1058 = vadd.f32 %v990, %v991
          %1059 = vadd.xlane.f32.xlu0 %v1058
          %v1060 = vpop.xlane.xlu0 %1059
          %v1061 = vadd.f32 %v992, %v993
          %1062 = vadd.xlane.f32.xlu0 %v1061
          %v1063 = vpop.xlane.xlu0 %1062
          %v1064 = vadd.f32 %v994, %v995
          %1065 = vadd.xlane.f32.xlu0 %v1064
          %v1066 = vpop.xlane.xlu0 %1065
          %v1067 = vadd.f32 %v996, %v997
          %1068 = vadd.xlane.f32.xlu0 %v1067
          %v1069 = vpop.xlane.xlu0 %1068
          %v1070 = vadd.f32 %v998, %v999
          %1071 = vadd.xlane.f32.xlu0 %v1070
          %v1072 = vpop.xlane.xlu0 %1071
          %v1073 = vadd.f32 %v1000, %v1001
          %1074 = vadd.xlane.f32.xlu0 %v1073
          %v1075 = vpop.xlane.xlu0 %1074
          %v1076 = vadd.f32 %v1002, %v1003
          %1077 = vadd.xlane.f32.xlu0 %v1076
          %v1078 = vpop.xlane.xlu0 %1077
          %v1079 = vadd.f32 %v1004, %v1005
          %1080 = vadd.xlane.f32.xlu0 %v1079
          %v1081 = vpop.xlane.xlu0 %1080
          %v1082 = vadd.f32 %v1006, %v1007
          %1083 = vadd.xlane.f32.xlu0 %v1082
          %v1084 = vpop.xlane.xlu0 %1083
          %v1085 = vadd.f32 %v1008, %v1009
          %1086 = vadd.xlane.f32.xlu0 %v1085
          %v1087 = vpop.xlane.xlu0 %1086
          %v1088 = vadd.f32 %v1010, %v1011
          %1089 = vadd.xlane.f32.xlu0 %v1088
          %v1090 = vpop.xlane.xlu0 %1089
          %v1091 = vadd.f32 %v1012, %v1013
          %1092 = vadd.xlane.f32.xlu0 %v1091
          %v1093 = vpop.xlane.xlu0 %1092
          %v1094 = vadd.f32 %v1014, %v1015
          %1095 = vadd.xlane.f32.xlu0 %v1094
          %v1096 = vpop.xlane.xlu0 %1095
          %v1097 = vadd.f32 %v1016, %v1017
          %1098 = vadd.xlane.f32.xlu0 %v1097
          %v1099 = vpop.xlane.xlu0 %1098
          %v1100 = vadd.f32 %v1018, %v1019
          %1101 = vadd.xlane.f32.xlu0 %v1100
          %v1102 = vpop.xlane.xlu0 %1101
          %v1103 = vadd.f32 %v1020, %v1021
          %1104 = vadd.xlane.f32.xlu0 %v1103
          %v1105 = vpop.xlane.xlu0 %1104
          %v1106 = vadd.f32 %v1022, %v1023
          %1107 = vadd.xlane.f32.xlu0 %v1106
          %v1108 = vpop.xlane.xlu0 %1107
          %v1109 = vadd.f32 %v1024, %v1025
          %1110 = vadd.xlane.f32.xlu0 %v1109
          %v1111 = vpop.xlane.xlu0 %1110
          %v1112 = vadd.f32 %v1026, %v1027
          %1113 = vadd.xlane.f32.xlu0 %v1112
          %v1114 = vpop.xlane.xlu0 %1113
          %v1115 = vadd.f32 %v1028, %v1029
          %1116 = vadd.xlane.f32.xlu0 %v1115
          %v1117 = vpop.xlane.xlu0 %1116
          %v1118 = vadd.f32 %v1030, %v1031
          %1119 = vadd.xlane.f32.xlu0 %v1118
          %v1120 = vpop.xlane.xlu0 %1119
          %v1121 = vadd.f32 %v1032, %v1033
          %1122 = vadd.xlane.f32.xlu0 %v1121
          %v1123 = vpop.xlane.xlu0 %1122
          %v1124 = vadd.f32 %v1034, %v1035
          %1125 = vadd.xlane.f32.xlu0 %v1124
          %v1126 = vpop.xlane.xlu0 %1125
          %v1127 = vadd.f32 %v1036, %v1037
          %1128 = vadd.xlane.f32.xlu0 %v1127
          %v1129 = vpop.xlane.xlu0 %1128
          %v1130 = vadd.f32 %v1038, %v1039
          %1131 = vadd.xlane.f32.xlu0 %v1130
          %v1132 = vpop.xlane.xlu0 %1131
          %v1133 = vadd.f32 %v1040, %v1041
          %1134 = vadd.xlane.f32.xlu0 %v1133
          %v1135 = vpop.xlane.xlu0 %1134
          %v1136 = vadd.f32 %v1042, %v1043
          %1137 = vadd.xlane.f32.xlu0 %v1136
          %v1138 = vpop.xlane.xlu0 %1137
          %v1139 = vadd.f32 %v1044, %v1045
          %1140 = vadd.xlane.f32.xlu0 %v1139
          %v1141 = vpop.xlane.xlu0 %1140
          %v1142 = vadd.f32 %v950, %v1048
          %v1143 = vadd.f32 %v951, %v1051
          %v1144 = vadd.f32 %v952, %v1054
          %v1145 = vadd.f32 %v953, %v1057
          %v1146 = vadd.f32 %v954, %v1060
          %v1147 = vadd.f32 %v955, %v1063
          %v1148 = vadd.f32 %v956, %v1066
          %v1149 = vadd.f32 %v957, %v1069
          %v1150 = vadd.f32 %v958, %v1072
          %v1151 = vadd.f32 %v959, %v1075
          %v1152 = vadd.f32 %v960, %v1078
          %v1153 = vadd.f32 %v961, %v1081
          %v1154 = vadd.f32 %v962, %v1084
          %v1155 = vadd.f32 %v963, %v1087
          %v1156 = vadd.f32 %v964, %v1090
          %v1157 = vadd.f32 %v965, %v1093
          %v1158 = vadd.f32 %v966, %v1096
          %v1159 = vadd.f32 %v967, %v1099
          %v1160 = vadd.f32 %v968, %v1102
          %v1161 = vadd.f32 %v969, %v1105
          %v1162 = vadd.f32 %v970, %v1108
          %v1163 = vadd.f32 %v971, %v1111
          %v1164 = vadd.f32 %v972, %v1114
          %v1165 = vadd.f32 %v973, %v1117
          %v1166 = vadd.f32 %v974, %v1120
          %v1167 = vadd.f32 %v975, %v1123
          %v1168 = vadd.f32 %v976, %v1126
          %v1169 = vadd.f32 %v977, %v1129
          %v1170 = vadd.f32 %v978, %v1132
          %v1171 = vadd.f32 %v979, %v1135
          %v1172 = vadd.f32 %v980, %v1138
          %v1173 = vadd.f32 %v981, %v1141
          %vm1174 = vcmask 7168
          %1175 = vst.msk [vmem:[#allocation3] sm:$0xff] %vm1174, %v1142
          %1176 = vst.msk [vmem:[#allocation3 + $0x8] sm:$0xff] %vm1174, %v1143
          %1177 = vst.msk [vmem:[#allocation3 + $0x10] sm:$0xff] %vm1174, %v1144
          %1178 = vst.msk [vmem:[#allocation3 + $0x18] sm:$0xff] %vm1174, %v1145
          %1179 = vst.msk [vmem:[#allocation3 + $0x20] sm:$0xff] %vm1174, %v1146
          %1180 = vst.msk [vmem:[#allocation3 + $0x28] sm:$0xff] %vm1174, %v1147
          %1181 = vst.msk [vmem:[#allocation3 + $0x30] sm:$0xff] %vm1174, %v1148
          %1182 = vst.msk [vmem:[#allocation3 + $0x38] sm:$0xff] %vm1174, %v1149
          %1183 = vst.msk [vmem:[#allocation3 + $0x40] sm:$0xff] %vm1174, %v1150
          %1184 = vst.msk [vmem:[#allocation3 + $0x48] sm:$0xff] %vm1174, %v1151
          %1185 = vst.msk [vmem:[#allocation3 + $0x50] sm:$0xff] %vm1174, %v1152
          %1186 = vst.msk [vmem:[#allocation3 + $0x58] sm:$0xff] %vm1174, %v1153
          %1187 = vst.msk [vmem:[#allocation3 + $0x60] sm:$0xff] %vm1174, %v1154
          %1188 = vst.msk [vmem:[#allocation3 + $0x68] sm:$0xff] %vm1174, %v1155
          %1189 = vst.msk [vmem:[#allocation3 + $0x70] sm:$0xff] %vm1174, %v1156
          %1190 = vst.msk [vmem:[#allocation3 + $0x78] sm:$0xff] %vm1174, %v1157
          %1191 = vst.msk [vmem:[#allocation3 + $0x80] sm:$0xff] %vm1174, %v1158
          %1192 = vst.msk [vmem:[#allocation3 + $0x88] sm:$0xff] %vm1174, %v1159
          %1193 = vst.msk [vmem:[#allocation3 + $0x90] sm:$0xff] %vm1174, %v1160
          %1194 = vst.msk [vmem:[#allocation3 + $0x98] sm:$0xff] %vm1174, %v1161
          %1195 = vst.msk [vmem:[#allocation3 + $0xa0] sm:$0xff] %vm1174, %v1162
          %1196 = vst.msk [vmem:[#allocation3 + $0xa8] sm:$0xff] %vm1174, %v1163
          %1197 = vst.msk [vmem:[#allocation3 + $0xb0] sm:$0xff] %vm1174, %v1164
          %1198 = vst.msk [vmem:[#allocation3 + $0xb8] sm:$0xff] %vm1174, %v1165
          %1199 = vst.msk [vmem:[#allocation3 + $0xc0] sm:$0xff] %vm1174, %v1166
          %1200 = vst.msk [vmem:[#allocation3 + $0xc8] sm:$0xff] %vm1174, %v1167
          %1201 = vst.msk [vmem:[#allocation3 + $0xd0] sm:$0xff] %vm1174, %v1168
          %1202 = vst.msk [vmem:[#allocation3 + $0xd8] sm:$0xff] %vm1174, %v1169
          %1203 = vst.msk [vmem:[#allocation3 + $0xe0] sm:$0xff] %vm1174, %v1170
          %1204 = vst.msk [vmem:[#allocation3 + $0xe8] sm:$0xff] %vm1174, %v1171
          %1205 = vst.msk [vmem:[#allocation3 + $0xf0] sm:$0xff] %vm1174, %v1172
          %1206 = vst.msk [vmem:[#allocation3 + $0xf8] sm:$0xff] %vm1174, %v1173
        $region56: #{tpu_custom_call.1} parent=35 // pred_fallthru
          _
        %p1207 = scmp.eq.s32.totalorder %s34, 1
        // Predicated region
        $region57: #{tpu_custom_call.1} parent=35 // pred_check
          %p1208 = pneg %p1207
        $region58: #{tpu_custom_call.1} parent=35 // pred_check_branch
          %1210 = sbr.rel (%p1208) target = $region60
        $region59: #{tpu_custom_call.1} parent=35 // pred_region
          %v1211 = vld [vmem:[#allocation2] sm:$0xff]
          %v1212 = vld [vmem:[#allocation2 + $0x8] sm:$0xff]
          %v1213 = vld [vmem:[#allocation2 + $0x10] sm:$0xff]
          %v1214 = vld [vmem:[#allocation2 + $0x18] sm:$0xff]
          %v1215 = vld [vmem:[#allocation2 + $0x20] sm:$0xff]
          %v1216 = vld [vmem:[#allocation2 + $0x28] sm:$0xff]
          %v1217 = vld [vmem:[#allocation2 + $0x30] sm:$0xff]
          %v1218 = vld [vmem:[#allocation2 + $0x38] sm:$0xff]
          %v1219 = vld [vmem:[#allocation2 + $0x40] sm:$0xff]
          %v1220 = vld [vmem:[#allocation2 + $0x48] sm:$0xff]
          %v1221 = vld [vmem:[#allocation2 + $0x50] sm:$0xff]
          %v1222 = vld [vmem:[#allocation2 + $0x58] sm:$0xff]
          %v1223 = vld [vmem:[#allocation2 + $0x60] sm:$0xff]
          %v1224 = vld [vmem:[#allocation2 + $0x68] sm:$0xff]
          %v1225 = vld [vmem:[#allocation2 + $0x70] sm:$0xff]
          %v1226 = vld [vmem:[#allocation2 + $0x78] sm:$0xff]
          %v1227 = vld [vmem:[#allocation2 + $0x80] sm:$0xff]
          %v1228 = vld [vmem:[#allocation2 + $0x88] sm:$0xff]
          %v1229 = vld [vmem:[#allocation2 + $0x90] sm:$0xff]
          %v1230 = vld [vmem:[#allocation2 + $0x98] sm:$0xff]
          %v1231 = vld [vmem:[#allocation2 + $0xa0] sm:$0xff]
          %v1232 = vld [vmem:[#allocation2 + $0xa8] sm:$0xff]
          %v1233 = vld [vmem:[#allocation2 + $0xb0] sm:$0xff]
          %v1234 = vld [vmem:[#allocation2 + $0xb8] sm:$0xff]
          %v1235 = vld [vmem:[#allocation2 + $0xc0] sm:$0xff]
          %v1236 = vld [vmem:[#allocation2 + $0xc8] sm:$0xff]
          %v1237 = vld [vmem:[#allocation2 + $0xd0] sm:$0xff]
          %v1238 = vld [vmem:[#allocation2 + $0xd8] sm:$0xff]
          %v1239 = vld [vmem:[#allocation2 + $0xe0] sm:$0xff]
          %v1240 = vld [vmem:[#allocation2 + $0xe8] sm:$0xff]
          %v1241 = vld [vmem:[#allocation2 + $0xf0] sm:$0xff]
          %v1242 = vld [vmem:[#allocation2 + $0xf8] sm:$0xff]
          %v1243 = vpack.c.bf16 %v1212, %v1211
          %v1244 = vpack.c.bf16 %v1214, %v1213
          %v1245 = vpack.c.bf16 %v1216, %v1215
          %v1246 = vpack.c.bf16 %v1218, %v1217
          %v1247 = vpack.c.bf16 %v1220, %v1219
          %v1248 = vpack.c.bf16 %v1222, %v1221
          %v1249 = vpack.c.bf16 %v1224, %v1223
          %v1250 = vpack.c.bf16 %v1226, %v1225
          %v1251 = vpack.c.bf16 %v1228, %v1227
          %v1252 = vpack.c.bf16 %v1230, %v1229
          %v1253 = vpack.c.bf16 %v1232, %v1231
          %v1254 = vpack.c.bf16 %v1234, %v1233
          %v1255 = vpack.c.bf16 %v1236, %v1235
          %v1256 = vpack.c.bf16 %v1238, %v1237
          %v1257 = vpack.c.bf16 %v1240, %v1239
          %v1258 = vpack.c.bf16 %v1242, %v1241
          %v1259 = vld [vmem:[#allocation11] sm:$0xf]
          %v1260 = vld [vmem:[#allocation11 + $0x4] sm:$0xf]
          %v1261 = vld [vmem:[#allocation11 + $0x8] sm:$0xf]
          %v1262 = vld [vmem:[#allocation11 + $0xc] sm:$0xf]
          %v1263 = vld [vmem:[#allocation11 + $0x10] sm:$0xf]
          %v1264 = vld [vmem:[#allocation11 + $0x14] sm:$0xf]
          %v1265 = vld [vmem:[#allocation11 + $0x18] sm:$0xf]
          %v1266 = vld [vmem:[#allocation11 + $0x1c] sm:$0xf]
          %v1267 = vld [vmem:[#allocation11 + $0x20] sm:$0xf]
          %v1268 = vld [vmem:[#allocation11 + $0x24] sm:$0xf]
          %v1269 = vld [vmem:[#allocation11 + $0x28] sm:$0xf]
          %v1270 = vld [vmem:[#allocation11 + $0x2c] sm:$0xf]
          %v1271 = vld [vmem:[#allocation11 + $0x30] sm:$0xf]
          %v1272 = vld [vmem:[#allocation11 + $0x34] sm:$0xf]
          %v1273 = vld [vmem:[#allocation11 + $0x38] sm:$0xf]
          %v1274 = vld [vmem:[#allocation11 + $0x3c] sm:$0xf]
          %v1275 = vld [vmem:[#allocation3] sm:$0xff]
          %v1276 = vld [vmem:[#allocation3 + $0x8] sm:$0xff]
          %v1277 = vld [vmem:[#allocation3 + $0x10] sm:$0xff]
          %v1278 = vld [vmem:[#allocation3 + $0x18] sm:$0xff]
          %v1279 = vld [vmem:[#allocation3 + $0x20] sm:$0xff]
          %v1280 = vld [vmem:[#allocation3 + $0x28] sm:$0xff]
          %v1281 = vld [vmem:[#allocation3 + $0x30] sm:$0xff]
          %v1282 = vld [vmem:[#allocation3 + $0x38] sm:$0xff]
          %v1283 = vld [vmem:[#allocation3 + $0x40] sm:$0xff]
          %v1284 = vld [vmem:[#allocation3 + $0x48] sm:$0xff]
          %v1285 = vld [vmem:[#allocation3 + $0x50] sm:$0xff]
          %v1286 = vld [vmem:[#allocation3 + $0x58] sm:$0xff]
          %v1287 = vld [vmem:[#allocation3 + $0x60] sm:$0xff]
          %v1288 = vld [vmem:[#allocation3 + $0x68] sm:$0xff]
          %v1289 = vld [vmem:[#allocation3 + $0x70] sm:$0xff]
          %v1290 = vld [vmem:[#allocation3 + $0x78] sm:$0xff]
          %v1291 = vld [vmem:[#allocation3 + $0x80] sm:$0xff]
          %v1292 = vld [vmem:[#allocation3 + $0x88] sm:$0xff]
          %v1293 = vld [vmem:[#allocation3 + $0x90] sm:$0xff]
          %v1294 = vld [vmem:[#allocation3 + $0x98] sm:$0xff]
          %v1295 = vld [vmem:[#allocation3 + $0xa0] sm:$0xff]
          %v1296 = vld [vmem:[#allocation3 + $0xa8] sm:$0xff]
          %v1297 = vld [vmem:[#allocation3 + $0xb0] sm:$0xff]
          %v1298 = vld [vmem:[#allocation3 + $0xb8] sm:$0xff]
          %v1299 = vld [vmem:[#allocation3 + $0xc0] sm:$0xff]
          %v1300 = vld [vmem:[#allocation3 + $0xc8] sm:$0xff]
          %v1301 = vld [vmem:[#allocation3 + $0xd0] sm:$0xff]
          %v1302 = vld [vmem:[#allocation3 + $0xd8] sm:$0xff]
          %v1303 = vld [vmem:[#allocation3 + $0xe0] sm:$0xff]
          %v1304 = vld [vmem:[#allocation3 + $0xe8] sm:$0xff]
          %v1305 = vld [vmem:[#allocation3 + $0xf0] sm:$0xff]
          %v1306 = vld [vmem:[#allocation3 + $0xf8] sm:$0xff]
          %v1307 = vld [vmem:[%s4] sm:$0x1]
          %1309 = vset.pattern.permute.xlu0 0
          %1310 = vperm.xlu0 %1309, %v1275
          %v1311 = vpop.permute.xlu0 %1310
          %1314 = vset.pattern.permute.xlu0 0
          %1315 = vperm.xlu0 %1314, %v1276
          %v1316 = vpop.permute.xlu0 %1315
          %1319 = vset.pattern.permute.xlu0 0
          %1320 = vperm.xlu0 %1319, %v1277
          %v1321 = vpop.permute.xlu0 %1320
          %1324 = vset.pattern.permute.xlu0 0
          %1325 = vperm.xlu0 %1324, %v1278
          %v1326 = vpop.permute.xlu0 %1325
          %1329 = vset.pattern.permute.xlu0 0
          %1330 = vperm.xlu0 %1329, %v1279
          %v1331 = vpop.permute.xlu0 %1330
          %1334 = vset.pattern.permute.xlu0 0
          %1335 = vperm.xlu0 %1334, %v1280
          %v1336 = vpop.permute.xlu0 %1335
          %1339 = vset.pattern.permute.xlu0 0
          %1340 = vperm.xlu0 %1339, %v1281
          %v1341 = vpop.permute.xlu0 %1340
          %1344 = vset.pattern.permute.xlu0 0
          %1345 = vperm.xlu0 %1344, %v1282
          %v1346 = vpop.permute.xlu0 %1345
          %1349 = vset.pattern.permute.xlu0 0
          %1350 = vperm.xlu0 %1349, %v1283
          %v1351 = vpop.permute.xlu0 %1350
          %1354 = vset.pattern.permute.xlu0 0
          %1355 = vperm.xlu0 %1354, %v1284
          %v1356 = vpop.permute.xlu0 %1355
          %1359 = vset.pattern.permute.xlu0 0
          %1360 = vperm.xlu0 %1359, %v1285
          %v1361 = vpop.permute.xlu0 %1360
          %1364 = vset.pattern.permute.xlu0 0
          %1365 = vperm.xlu0 %1364, %v1286
          %v1366 = vpop.permute.xlu0 %1365
          %1369 = vset.pattern.permute.xlu0 0
          %1370 = vperm.xlu0 %1369, %v1287
          %v1371 = vpop.permute.xlu0 %1370
          %1374 = vset.pattern.permute.xlu0 0
          %1375 = vperm.xlu0 %1374, %v1288
          %v1376 = vpop.permute.xlu0 %1375
          %1379 = vset.pattern.permute.xlu0 0
          %1380 = vperm.xlu0 %1379, %v1289
          %v1381 = vpop.permute.xlu0 %1380
          %1384 = vset.pattern.permute.xlu0 0
          %1385 = vperm.xlu0 %1384, %v1290
          %v1386 = vpop.permute.xlu0 %1385
          %1389 = vset.pattern.permute.xlu0 0
          %1390 = vperm.xlu0 %1389, %v1291
          %v1391 = vpop.permute.xlu0 %1390
          %1394 = vset.pattern.permute.xlu0 0
          %1395 = vperm.xlu0 %1394, %v1292
          %v1396 = vpop.permute.xlu0 %1395
          %1399 = vset.pattern.permute.xlu0 0
          %1400 = vperm.xlu0 %1399, %v1293
          %v1401 = vpop.permute.xlu0 %1400
          %1404 = vset.pattern.permute.xlu0 0
          %1405 = vperm.xlu0 %1404, %v1294
          %v1406 = vpop.permute.xlu0 %1405
          %1409 = vset.pattern.permute.xlu0 0
          %1410 = vperm.xlu0 %1409, %v1295
          %v1411 = vpop.permute.xlu0 %1410
          %1414 = vset.pattern.permute.xlu0 0
          %1415 = vperm.xlu0 %1414, %v1296
          %v1416 = vpop.permute.xlu0 %1415
          %1419 = vset.pattern.permute.xlu0 0
          %1420 = vperm.xlu0 %1419, %v1297
          %v1421 = vpop.permute.xlu0 %1420
          %1424 = vset.pattern.permute.xlu0 0
          %1425 = vperm.xlu0 %1424, %v1298
          %v1426 = vpop.permute.xlu0 %1425
          %1429 = vset.pattern.permute.xlu0 0
          %1430 = vperm.xlu0 %1429, %v1299
          %v1431 = vpop.permute.xlu0 %1430
          %1434 = vset.pattern.permute.xlu0 0
          %1435 = vperm.xlu0 %1434, %v1300
          %v1436 = vpop.permute.xlu0 %1435
          %1439 = vset.pattern.permute.xlu0 0
          %1440 = vperm.xlu0 %1439, %v1301
          %v1441 = vpop.permute.xlu0 %1440
          %1444 = vset.pattern.permute.xlu0 0
          %1445 = vperm.xlu0 %1444, %v1302
          %v1446 = vpop.permute.xlu0 %1445
          %1449 = vset.pattern.permute.xlu0 0
          %1450 = vperm.xlu0 %1449, %v1303
          %v1451 = vpop.permute.xlu0 %1450
          %1454 = vset.pattern.permute.xlu0 0
          %1455 = vperm.xlu0 %1454, %v1304
          %v1456 = vpop.permute.xlu0 %1455
          %1459 = vset.pattern.permute.xlu0 0
          %1460 = vperm.xlu0 %1459, %v1305
          %v1461 = vpop.permute.xlu0 %1460
          %1464 = vset.pattern.permute.xlu0 0
          %1465 = vperm.xlu0 %1464, %v1306
          %v1466 = vpop.permute.xlu0 %1465
          %v1469 = vlaneseq
          %v1470 = vshrl.u32 %v1469, 7
          %v1471 = vsub.s32 0, %v1470
          %v1472 = vrot.slane %v1307, %v1471
          %v1474 = vmul.f32 %v1311, %v1472
          %v1475 = vmul.f32 %v1316, %v1472
          %v1476 = vmul.f32 %v1321, %v1472
          %v1477 = vmul.f32 %v1326, %v1472
          %v1478 = vmul.f32 %v1331, %v1472
          %v1479 = vmul.f32 %v1336, %v1472
          %v1480 = vmul.f32 %v1341, %v1472
          %v1481 = vmul.f32 %v1346, %v1472
          %v1482 = vmul.f32 %v1351, %v1472
          %v1483 = vmul.f32 %v1356, %v1472
          %v1484 = vmul.f32 %v1361, %v1472
          %v1485 = vmul.f32 %v1366, %v1472
          %v1486 = vmul.f32 %v1371, %v1472
          %v1487 = vmul.f32 %v1376, %v1472
          %v1488 = vmul.f32 %v1381, %v1472
          %v1489 = vmul.f32 %v1386, %v1472
          %v1490 = vmul.f32 %v1391, %v1472
          %v1491 = vmul.f32 %v1396, %v1472
          %v1492 = vmul.f32 %v1401, %v1472
          %v1493 = vmul.f32 %v1406, %v1472
          %v1494 = vmul.f32 %v1411, %v1472
          %v1495 = vmul.f32 %v1416, %v1472
          %v1496 = vmul.f32 %v1421, %v1472
          %v1497 = vmul.f32 %v1426, %v1472
          %v1498 = vmul.f32 %v1431, %v1472
          %v1499 = vmul.f32 %v1436, %v1472
          %v1500 = vmul.f32 %v1441, %v1472
          %v1501 = vmul.f32 %v1446, %v1472
          %v1502 = vmul.f32 %v1451, %v1472
          %v1503 = vmul.f32 %v1456, %v1472
          %v1504 = vmul.f32 %v1461, %v1472
          %v1505 = vmul.f32 %v1466, %v1472
          %v1522 = vunpack.c.l.b16 %v1259
          %v1523 = vunpack.c.l.b16 %v1260
          %v1524 = vunpack.c.l.b16 %v1261
          %v1525 = vunpack.c.l.b16 %v1262
          %v1526 = vunpack.c.l.b16 %v1263
          %v1527 = vunpack.c.l.b16 %v1264
          %v1528 = vunpack.c.l.b16 %v1265
          %v1529 = vunpack.c.l.b16 %v1266
          %v1530 = vunpack.c.l.b16 %v1267
          %v1531 = vunpack.c.l.b16 %v1268
          %v1532 = vunpack.c.l.b16 %v1269
          %v1533 = vunpack.c.l.b16 %v1270
          %v1534 = vunpack.c.l.b16 %v1271
          %v1535 = vunpack.c.l.b16 %v1272
          %v1536 = vunpack.c.l.b16 %v1273
          %v1537 = vunpack.c.l.b16 %v1274
          %v1538 = vpack.c.b16 %v1523, %v1522
          %v1539 = vpack.c.b16 %v1525, %v1524
          %v1540 = vpack.c.b16 %v1527, %v1526
          %v1541 = vpack.c.b16 %v1529, %v1528
          %v1542 = vpack.c.b16 %v1531, %v1530
          %v1543 = vpack.c.b16 %v1533, %v1532
          %v1544 = vpack.c.b16 %v1535, %v1534
          %v1545 = vpack.c.b16 %v1537, %v1536
          %1554 = vmatprep.subr.bf16.mxu0 0
          %1555 = vmatpush1.bf16.msra.mxu0 %v1538
          %1556 = vmatprep.subr.bf16.mxu0 0
          %1557 = vmatpush1.bf16.msra.mxu0 %v1539
          %1558 = vmatprep.subr.bf16.mxu0 0
          %1559 = vmatpush1.bf16.msra.mxu0 %v1540
          %1560 = vmatprep.subr.bf16.mxu0 0
          %1561 = vmatpush1.bf16.msra.mxu0 %v1541
          %1562 = vmatprep.subr.bf16.mxu0 0
          %1563 = vmatpush1.bf16.msra.mxu0 %v1542
          %1564 = vmatprep.subr.bf16.mxu0 0
          %1565 = vmatpush1.bf16.msra.mxu0 %v1543
          %1566 = vmatprep.subr.bf16.mxu0 0
          %1567 = vmatpush1.bf16.msra.mxu0 %v1544
          %1568 = vmatprep.subr.bf16.mxu0 0
          %1569 = vmatpush1.bf16.msra.mxu0 %v1545
          %1570 = vmatprep.subr.bf16.mxu0 0
          %1571 = vmatpush1.bf16.msra.mxu0 0
          %1572 = vmatprep.subr.bf16.mxu0 0
          %1573 = vmatpush1.bf16.msra.mxu0 0
          %1574 = vmatprep.subr.bf16.mxu0 0
          %1575 = vmatpush1.bf16.msra.mxu0 0
          %1576 = vmatprep.subr.bf16.mxu0 0
          %1577 = vmatpush1.bf16.msra.mxu0 0
          %1578 = vmatprep.subr.bf16.mxu0 0
          %1579 = vmatpush1.bf16.msra.mxu0 0
          %1580 = vmatprep.subr.bf16.mxu0 0
          %1581 = vmatpush1.bf16.msra.mxu0 0
          %1582 = vmatprep.subr.bf16.mxu0 0
          %1583 = vmatpush1.bf16.msra.mxu0 0
          %1584 = vmatprep.subr.bf16.mxu0 0
          %1585 = vmatpush1.bf16.msra.mxu0 0
          %1586 = vmatprep.mubr.bf16.mxu0 0
          %1587 = vmatmul.mubr.bf16.gmra.mrb[0].mxu0 %v1243
          %v1588 = vpop.f32.mrb[0].mxu0
          %v1589 = vadd.f32 %v1474, %v1588
          %v1590 = vpop.f32.mrb[0].mxu0
          %v1591 = vpop.f32.mrb[0].mxu0
          %v1592 = vadd.f32 %v1475, %v1591
          %v1593 = vpop.f32.mrb[0].mxu0
          %1594 = vmatprep.mubr.bf16.mxu0 0
          %1595 = vmatmul.mubr.bf16.gmra.mrb[0].mxu0 %v1244
          %v1596 = vpop.f32.mrb[0].mxu0
          %v1597 = vadd.f32 %v1476, %v1596
          %v1598 = vpop.f32.mrb[0].mxu0
          %v1599 = vpop.f32.mrb[0].mxu0
          %v1600 = vadd.f32 %v1477, %v1599
          %v1601 = vpop.f32.mrb[0].mxu0
          %1602 = vmatprep.mubr.bf16.mxu0 0
          %1603 = vmatmul.mubr.bf16.gmra.mrb[0].mxu0 %v1245
          %v1604 = vpop.f32.mrb[0].mxu0
          %v1605 = vadd.f32 %v1478, %v1604
          %v1606 = vpop.f32.mrb[0].mxu0
          %v1607 = vpop.f32.mrb[0].mxu0
          %v1608 = vadd.f32 %v1479, %v1607
          %v1609 = vpop.f32.mrb[0].mxu0
          %1610 = vmatprep.mubr.bf16.mxu0 0
          %1611 = vmatmul.mubr.bf16.gmra.mrb[0].mxu0 %v1246
          %v1612 = vpop.f32.mrb[0].mxu0
          %v1613 = vadd.f32 %v1480, %v1612
          %v1614 = vpop.f32.mrb[0].mxu0
          %v1615 = vpop.f32.mrb[0].mxu0
          %v1616 = vadd.f32 %v1481, %v1615
          %v1617 = vpop.f32.mrb[0].mxu0
          %1618 = vmatprep.mubr.bf16.mxu0 0
          %1619 = vmatmul.mubr.bf16.gmra.mrb[0].mxu0 %v1247
          %v1620 = vpop.f32.mrb[0].mxu0
          %v1621 = vadd.f32 %v1482, %v1620
          %v1622 = vpop.f32.mrb[0].mxu0
          %v1623 = vpop.f32.mrb[0].mxu0
          %v1624 = vadd.f32 %v1483, %v1623
          %v1625 = vpop.f32.mrb[0].mxu0
          %1626 = vmatprep.mubr.bf16.mxu0 0
          %1627 = vmatmul.mubr.bf16.gmra.mrb[0].mxu0 %v1248
          %v1628 = vpop.f32.mrb[0].mxu0
          %v1629 = vadd.f32 %v1484, %v1628
          %v1630 = vpop.f32.mrb[0].mxu0
          %v1631 = vpop.f32.mrb[0].mxu0
          %v1632 = vadd.f32 %v1485, %v1631
          %v1633 = vpop.f32.mrb[0].mxu0
          %1634 = vmatprep.mubr.bf16.mxu0 0
          %1635 = vmatmul.mubr.bf16.gmra.mrb[0].mxu0 %v1249
          %v1636 = vpop.f32.mrb[0].mxu0
          %v1637 = vadd.f32 %v1486, %v1636
          %v1638 = vpop.f32.mrb[0].mxu0
          %v1639 = vpop.f32.mrb[0].mxu0
          %v1640 = vadd.f32 %v1487, %v1639
          %v1641 = vpop.f32.mrb[0].mxu0
          %1642 = vmatprep.mubr.bf16.mxu0 0
          %1643 = vmatmul.mubr.bf16.gmra.mrb[0].mxu0 %v1250
          %v1644 = vpop.f32.mrb[0].mxu0
          %v1645 = vadd.f32 %v1488, %v1644
          %v1646 = vpop.f32.mrb[0].mxu0
          %v1647 = vpop.f32.mrb[0].mxu0
          %v1648 = vadd.f32 %v1489, %v1647
          %v1649 = vpop.f32.mrb[0].mxu0
          %1650 = vmatprep.mubr.bf16.mxu0 0
          %1651 = vmatmul.mubr.bf16.gmra.mrb[0].mxu0 %v1251
          %v1652 = vpop.f32.mrb[0].mxu0
          %v1653 = vadd.f32 %v1490, %v1652
          %v1654 = vpop.f32.mrb[0].mxu0
          %v1655 = vpop.f32.mrb[0].mxu0
          %v1656 = vadd.f32 %v1491, %v1655
          %v1657 = vpop.f32.mrb[0].mxu0
          %1658 = vmatprep.mubr.bf16.mxu0 0
          %1659 = vmatmul.mubr.bf16.gmra.mrb[0].mxu0 %v1252
          %v1660 = vpop.f32.mrb[0].mxu0
          %v1661 = vadd.f32 %v1492, %v1660
          %v1662 = vpop.f32.mrb[0].mxu0
          %v1663 = vpop.f32.mrb[0].mxu0
          %v1664 = vadd.f32 %v1493, %v1663
          %v1665 = vpop.f32.mrb[0].mxu0
          %1666 = vmatprep.mubr.bf16.mxu0 0
          %1667 = vmatmul.mubr.bf16.gmra.mrb[0].mxu0 %v1253
          %v1668 = vpop.f32.mrb[0].mxu0
          %v1669 = vadd.f32 %v1494, %v1668
          %v1670 = vpop.f32.mrb[0].mxu0
          %v1671 = vpop.f32.mrb[0].mxu0
          %v1672 = vadd.f32 %v1495, %v1671
          %v1673 = vpop.f32.mrb[0].mxu0
          %1674 = vmatprep.mubr.bf16.mxu0 0
          %1675 = vmatmul.mubr.bf16.gmra.mrb[0].mxu0 %v1254
          %v1676 = vpop.f32.mrb[0].mxu0
          %v1677 = vadd.f32 %v1496, %v1676
          %v1678 = vpop.f32.mrb[0].mxu0
          %v1679 = vpop.f32.mrb[0].mxu0
          %v1680 = vadd.f32 %v1497, %v1679
          %v1681 = vpop.f32.mrb[0].mxu0
          %1682 = vmatprep.mubr.bf16.mxu0 0
          %1683 = vmatmul.mubr.bf16.gmra.mrb[0].mxu0 %v1255
          %v1684 = vpop.f32.mrb[0].mxu0
          %v1685 = vadd.f32 %v1498, %v1684
          %v1686 = vpop.f32.mrb[0].mxu0
          %v1687 = vpop.f32.mrb[0].mxu0
          %v1688 = vadd.f32 %v1499, %v1687
          %v1689 = vpop.f32.mrb[0].mxu0
          %1690 = vmatprep.mubr.bf16.mxu0 0
          %1691 = vmatmul.mubr.bf16.gmra.mrb[0].mxu0 %v1256
          %v1692 = vpop.f32.mrb[0].mxu0
          %v1693 = vadd.f32 %v1500, %v1692
          %v1694 = vpop.f32.mrb[0].mxu0
          %v1695 = vpop.f32.mrb[0].mxu0
          %v1696 = vadd.f32 %v1501, %v1695
          %v1697 = vpop.f32.mrb[0].mxu0
          %1698 = vmatprep.mubr.bf16.mxu0 0
          %1699 = vmatmul.mubr.bf16.gmra.mrb[0].mxu0 %v1257
          %v1700 = vpop.f32.mrb[0].mxu0
          %v1701 = vadd.f32 %v1502, %v1700
          %v1702 = vpop.f32.mrb[0].mxu0
          %v1703 = vpop.f32.mrb[0].mxu0
          %v1704 = vadd.f32 %v1503, %v1703
          %v1705 = vpop.f32.mrb[0].mxu0
          %1706 = vmatprep.mubr.bf16.mxu0 0
          %1707 = vmatmul.mubr.bf16.gmra.mrb[0].mxu0 %v1258
          %v1708 = vpop.f32.mrb[0].mxu0
          %v1709 = vadd.f32 %v1504, %v1708
          %v1710 = vpop.f32.mrb[0].mxu0
          %v1711 = vpop.f32.mrb[0].mxu0
          %v1712 = vadd.f32 %v1505, %v1711
          %v1713 = vpop.f32.mrb[0].mxu0
          %1714 = vdwg.mxu0
          %v1715 = vmax.f32 %v1589, 0.0
          %v1716 = vmax.f32 %v1592, 0.0
          %v1717 = vmax.f32 %v1597, 0.0
          %v1718 = vmax.f32 %v1600, 0.0
          %v1719 = vmax.f32 %v1605, 0.0
          %v1720 = vmax.f32 %v1608, 0.0
          %v1721 = vmax.f32 %v1613, 0.0
          %v1722 = vmax.f32 %v1616, 0.0
          %v1723 = vmax.f32 %v1621, 0.0
          %v1724 = vmax.f32 %v1624, 0.0
          %v1725 = vmax.f32 %v1629, 0.0
          %v1726 = vmax.f32 %v1632, 0.0
          %v1727 = vmax.f32 %v1637, 0.0
          %v1728 = vmax.f32 %v1640, 0.0
          %v1729 = vmax.f32 %v1645, 0.0
          %v1730 = vmax.f32 %v1648, 0.0
          %v1731 = vmax.f32 %v1653, 0.0
          %v1732 = vmax.f32 %v1656, 0.0
          %v1733 = vmax.f32 %v1661, 0.0
          %v1734 = vmax.f32 %v1664, 0.0
          %v1735 = vmax.f32 %v1669, 0.0
          %v1736 = vmax.f32 %v1672, 0.0
          %v1737 = vmax.f32 %v1677, 0.0
          %v1738 = vmax.f32 %v1680, 0.0
          %v1739 = vmax.f32 %v1685, 0.0
          %v1740 = vmax.f32 %v1688, 0.0
          %v1741 = vmax.f32 %v1693, 0.0
          %v1742 = vmax.f32 %v1696, 0.0
          %v1743 = vmax.f32 %v1701, 0.0
          %v1744 = vmax.f32 %v1704, 0.0
          %v1745 = vmax.f32 %v1709, 0.0
          %v1746 = vmax.f32 %v1712, 0.0
          %1747 = vst [vmem:[%s291] sm:$0xff] %v1715
          %1748 = vst [vmem:[%s291 + $0x8] sm:$0xff] %v1716
          %1749 = vst [vmem:[%s291 + $0x10] sm:$0xff] %v1717
          %1750 = vst [vmem:[%s291 + $0x18] sm:$0xff] %v1718
          %1751 = vst [vmem:[%s291 + $0x20] sm:$0xff] %v1719
          %1752 = vst [vmem:[%s291 + $0x28] sm:$0xff] %v1720
          %1753 = vst [vmem:[%s291 + $0x30] sm:$0xff] %v1721
          %1754 = vst [vmem:[%s291 + $0x38] sm:$0xff] %v1722
          %1755 = vst [vmem:[%s291 + $0x40] sm:$0xff] %v1723
          %1756 = vst [vmem:[%s291 + $0x48] sm:$0xff] %v1724
          %1757 = vst [vmem:[%s291 + $0x50] sm:$0xff] %v1725
          %1758 = vst [vmem:[%s291 + $0x58] sm:$0xff] %v1726
          %1759 = vst [vmem:[%s291 + $0x60] sm:$0xff] %v1727
          %1760 = vst [vmem:[%s291 + $0x68] sm:$0xff] %v1728
          %1761 = vst [vmem:[%s291 + $0x70] sm:$0xff] %v1729
          %1762 = vst [vmem:[%s291 + $0x78] sm:$0xff] %v1730
          %1763 = vst [vmem:[%s291 + $0x80] sm:$0xff] %v1731
          %1764 = vst [vmem:[%s291 + $0x88] sm:$0xff] %v1732
          %1765 = vst [vmem:[%s291 + $0x90] sm:$0xff] %v1733
          %1766 = vst [vmem:[%s291 + $0x98] sm:$0xff] %v1734
          %1767 = vst [vmem:[%s291 + $0xa0] sm:$0xff] %v1735
          %1768 = vst [vmem:[%s291 + $0xa8] sm:$0xff] %v1736
          %1769 = vst [vmem:[%s291 + $0xb0] sm:$0xff] %v1737
          %1770 = vst [vmem:[%s291 + $0xb8] sm:$0xff] %v1738
          %1771 = vst [vmem:[%s291 + $0xc0] sm:$0xff] %v1739
          %1772 = vst [vmem:[%s291 + $0xc8] sm:$0xff] %v1740
          %1773 = vst [vmem:[%s291 + $0xd0] sm:$0xff] %v1741
          %1774 = vst [vmem:[%s291 + $0xd8] sm:$0xff] %v1742
          %1775 = vst [vmem:[%s291 + $0xe0] sm:$0xff] %v1743
          %1776 = vst [vmem:[%s291 + $0xe8] sm:$0xff] %v1744
          %1777 = vst [vmem:[%s291 + $0xf0] sm:$0xff] %v1745
          %1778 = vst [vmem:[%s291 + $0xf8] sm:$0xff] %v1746
        $region60: #{tpu_custom_call.1} parent=35 // pred_fallthru
          _
        %s1779 = sand.u32 %s145, 1
        %s1780 = scalar_lea.sflag [#allocation8], %s1779
        %s1781 = sand.u32 %s145, 1
        %s1782 = smul.addr %s1781, 256
        %s1783 = scalar_lea.vmem [#allocation12], %s1782
        // Predicated region
        $region61: #{tpu_custom_call.1} parent=35 // pred_check
          %p1784 = pneg %p155
        $region62: #{tpu_custom_call.1} parent=35 // pred_check_branch
          %1786 = sbr.rel (%p1784) target = $region64
        $region63: #{tpu_custom_call.1} parent=35 // pred_region
          %s1787 = smul.u32 32, %s33
          %s1789 = ssub.s32 4096, 4096
          %1790 = vsyncadd %s1780, %s1789
          %s1791 = smul.addr %s1787, 128
          %s1792 = scalar_lea.hbm %s5, %s1791
          %s1793 = sshll.u32 %s1783, 4
          %s1794 = int_to_ptr.vmem [resolvable:$true] %s1793
          %1799 = dma.vmem_to_hbm [thread:$0]  %s1794, 4096, %s1792, %s1780, 128, 128, 8
        $region64: #{tpu_custom_call.1} parent=35 // pred_fallthru
          _
      $region36: #{tpu_custom_call.1} parent=5 // pred_fallthru
        _
      %p1800 = scmp.le.s32.totalorder 2, %s24
      // Predicated region
      $region65: #{tpu_custom_call.1} parent=5 // pred_check
        %p1801 = pneg %p1800
      $region66: #{tpu_custom_call.1} parent=5 // pred_check_branch
        %1803 = sbr.rel (%p1801) target = $region68
      $region67: #{tpu_custom_call.1} parent=5 // pred_region
        %s1804 = ssub.s32 %s24, 2
        // Predicated region
        $region69: #{tpu_custom_call.1} parent=67 // pred_check
          %p1805 = pneg %p161
        $region70: #{tpu_custom_call.1} parent=67 // pred_check_branch
          %1807 = sbr.rel (%p1805) target = $region72
        $region71: #{tpu_custom_call.1} parent=67 // pred_region
          %s1808 = sand.u32 %s146, 1
          %s1809 = scalar_lea.sflag [#allocation8], %s1808
          %s1810 = sand.u32 %s146, 1
          %s1811 = smul.addr %s1810, 256
          %s1812 = scalar_lea.vmem [#allocation12], %s1811
          %1813 = dma.done %s1809, 4096
        $region72: #{tpu_custom_call.1} parent=67 // pred_fallthru
          _
      $region68: #{tpu_custom_call.1} parent=5 // pred_fallthru
        _
    $region6: #{tpu_custom_call.1} parent=1 // loop_footer
      %s28 = sadd.s32 1, %s24
    $region7: #{tpu_custom_call.1} parent=1 // loop_footer_branch
      %23 = sbr.rel target = $region3
    $region8: #{tpu_custom_call.1} parent=1 // loop_exit
      _
    %1814 = vsyncpa [#allocation7], 1
    %s1815 = scalar_lea.sflag [#allocation7], 1
    %1816 = vsyncpa %s1815, 1
    %1817 = vsyncpa [#allocation10], 1
    %s1818 = scalar_lea.sflag [#allocation10], 1
    %1819 = vsyncpa %s1818, 1
    %1820 = vsyncpa [#allocation8], 1
    %s1821 = scalar_lea.sflag [#allocation8], 1
    %1822 = vsyncpa %s1821, 1

</llo_original>
